<compile_context>
chip_gen: v5e
topology: v5e:2x2
jax: 0.10.0
libtpu: 0.0.40
codegen_flags: <defaults>
</compile_context>

<pallas_src>
import math

import jax
import jax.numpy as jnp
from jax.experimental import pallas as pl
from jax.experimental.pallas import tpu as pltpu

_N_SQUARINGS = 5  # L^(2^5) = L^32 for the dominant-eigenvalue estimate


def _phycell_kernel(
    xT_ref,        # (1, BN, D*T)    inputs_1, node-major, batches folded on sublanes
    inp2_ref,      # (1, T2, BN, BN) inputs_2, block-diagonal over folded batches
    colsumT_ref,   # (1, BN, T2)     sum_i inputs_2[t, i, :], transposed
    hT_ref,        # (1, BN, Kh)     hidden state, node-major
    gall_ref,      # (BN, BN)        block-diag(graph_all)
    eye_ref,       # (BN, BN)
    sel_ref,       # (G, BN)         0/1 block (batch) selector
    selT_ref,      # (BN, G)
    waggT_ref,     # (D*T, T)        agg_linear expanded
    agg_b_ref,     # (1, T)
    time_wT_ref,   # (T, T)
    time_b_ref,    # (1, T)
    pairT_ref,     # (T, T2)         pairwise-sum matrix
    wgcn_ref,      # (Ks, D*T, T*c_out)  theta expanded
    gcn_b_ref,     # (1, T*c_out)
    wiT_ref,       # (TC, 3*Kh)      GRU input weights (r|z|n packed)
    whT_ref,       # (Kh, 3*Kh)      GRU hidden weights (r|z|n packed)
    b_rz_ref,      # (1, 2*Kh)       b_ih[:2Kh] + b_hh[:2Kh]
    b_in_ref,      # (1, Kh)
    b_hn_ref,      # (1, Kh)
    awT_ref,       # (Kh, 2*T2)      arr_linear rows 0|1 fused
    arr_b_ref,     # (1, 2*T2)
    out_ref,       # (1, BN, Kh + PAD)  h_new in [:, :Kh], phy broadcast in [:, Kh:]
):
    f32 = jnp.float32
    BN = eye_ref.shape[0]
    T2 = inp2_ref.shape[1]
    Ks = wgcn_ref.shape[0]
    Kh = whT_ref.shape[0]
    PAD = out_ref.shape[2] - Kh

    xT = xT_ref[0]                                      # (BN, D*T)
    h = hT_ref[0]                                       # (BN, Kh)
    eye = eye_ref[...]
    sel = sel_ref[...]                                  # (G, BN)
    selT = selT_ref[...]                                # (BN, G)

    # ---------------- TimeAttention (node-major MXU matmuls) -----------------
    aggT = jnp.maximum(
        jnp.dot(xT, waggT_ref[...], preferred_element_type=f32) + agg_b_ref[...],
        0.0)                                            # (BN, T)
    At = (jnp.dot(aggT, time_wT_ref[...], preferred_element_type=f32)
          + time_b_ref[...])                            # (BN, T)
    e = jnp.exp(At - jnp.max(At, axis=-1, keepdims=True))
    taw = e * pl.reciprocal(jnp.sum(e, axis=-1, keepdims=True), approx=True)
    att = jnp.dot(taw, pairT_ref[...], preferred_element_type=f32)     # (BN, T2)

    # ---------------- graph construction (block-diag per folded batch) -------
    g = att[:, 0:1] * inp2_ref[0, 0]
    for t in range(1, T2):                              # T2 is tiny (=4)
        g = g + att[:, t:t + 1] * inp2_ref[0, t]
    # F.normalize(p=1, dim=1): divide each column by its L1 norm.
    den = jnp.maximum(jnp.sum(jnp.abs(g), axis=0, keepdims=True), 1e-12)
    g = g * pl.reciprocal(den, approx=True)
    g = g + eye + gall_ref[...]

    # ---------------- scaled Laplacian ---------------------------------------
    d = jnp.sum(g, axis=1, keepdims=True)               # (BN, 1) row sums
    L0 = -g * (1.0 - eye) + eye * d                     # diagonal replaced by d
    rs = jax.lax.rsqrt(d)                               # 1/sqrt(d)
    # L[n,m] = L0[n,m] / sqrt(d_n d_m): row scale on VPU, column scale = 1 matmul
    L = jnp.dot(rs * L0, eye * rs, preferred_element_type=f32)

    # ------------- lambda_max per batch: repeated squaring + Rayleigh --------
    # TODO(synk): torch uses torch.linalg.eigvals (dense non-symmetric eig);
    # approximated here by a single L^32 power step + Rayleigh quotient.
    P = L
    for _ in range(_N_SQUARINGS):
        P = jnp.dot(P, P, preferred_element_type=f32)   # L^2, L^4, ..., L^32
    W = jnp.dot(sel, P, preferred_element_type=f32)     # (G, BN), block-supported
    WL = jnp.dot(W, L, preferred_element_type=f32)
    num = jnp.sum(WL * W, axis=1, keepdims=True)        # (G, 1)
    den_r = jnp.sum(W * W, axis=1, keepdims=True)
    lam = num * pl.reciprocal(den_r + 1e-12, approx=True)
    # sign-preserving guard against degenerate graphs
    lam = jnp.where(jnp.abs(lam) < 1e-6,
                    jnp.where(lam < 0.0, -1e-6, 1e-6), lam)
    inv2 = 2.0 * pl.reciprocal(lam, approx=True)        # (G, 1) = 2/lambda_max
    inv_full = jnp.dot(selT, inv2, preferred_element_type=f32)          # (BN, 1)
    Ls = L * inv_full - eye

    # ----- Chebyshev recursion on z_k = T_k(Ls) @ x (no T_k materialized) ----
    acc = jnp.dot(xT, wgcn_ref[0], preferred_element_type=f32)          # k = 0
    z_prev = xT
    z_cur = jnp.dot(Ls, xT, preferred_element_type=f32)                 # k = 1
    acc = acc + jnp.dot(z_cur, wgcn_ref[1], preferred_element_type=f32)
    for k in range(2, Ks):
        z_next = (2.0 * jnp.dot(Ls, z_cur, preferred_element_type=f32) - z_prev)
        acc = acc + jnp.dot(z_next, wgcn_ref[k], preferred_element_type=f32)
        z_prev, z_cur = z_cur, z_next
    # TODO(synk): F.dropout(p=0.3) is identity in eval mode.
    xg = jnp.maximum(acc + gcn_b_ref[...], 0.0)                         # (BN, TC)

    # ---------------- GRUCell (PyTorch gate order r | z | n) -----------------
    gi = jnp.dot(xg, wiT_ref[...], preferred_element_type=f32)          # on chain
    gh = jnp.dot(h, whT_ref[...], preferred_element_type=f32)           # off chain
    rz = jax.nn.sigmoid(gi[:, :2 * Kh] + gh[:, :2 * Kh] + b_rz_ref[...])
    r = rz[:, :Kh]
    z = rz[:, Kh:]
    n = jnp.tanh(gi[:, 2 * Kh:] + b_in_ref[...] + r * (gh[:, 2 * Kh:] + b_hn_ref[...]))
    h_new = (1.0 - z) * n + z * h                                       # (BN, Kh)

    # ------------- decay matrix / physical aggregation (one fused dot) -------
    # phy[m] = sum_t arr2[t,m] * sum_j colsum[t,j] * arr1[t,j]
    a = jax.nn.sigmoid(jnp.dot(h_new, awT_ref[...], preferred_element_type=f32)
                       + arr_b_ref[...])                                # (BN, 2*T2)
    a1 = a[:, :T2]
    a2 = a[:, T2:]
    s = jnp.dot(sel, colsumT_ref[0] * a1, preferred_element_type=f32)   # (G, T2)
    s_full = jnp.dot(selT, s, preferred_element_type=f32)               # (BN, T2)
    phy = jnp.sum(a2 * s_full, axis=1, keepdims=True)                   # (BN, 1)

    # merged, single output slab
    out_ref[0, :, :Kh] = h_new
    out_ref[0, :, Kh:] = jnp.broadcast_to(phy, (BN, PAD))


def phycell_forward(params, inputs_1, inputs_2, h_input, graph_all, *,
                    batch_block=None):
    """batch_block = number of batches folded per grid step.
    Default (None) folds all B batches -> grid=(1,), best on single-TC v5e/v6e.
    On v7x pass batch_block=B//2 so both TensorCores get a grid step."""
    f32 = jnp.float32
    B, T, N, D = inputs_1.shape
    T2 = T // 2
    Kh = h_input.shape[1]
    H = Kh // T2
    Ks, DT, TC = params["w_gcn"].shape            # (Ks, D*T, T*c_out)
    assert DT == D * T

    G = B if batch_block is None else batch_block
    assert B % G == 0
    NG = B // G                                   # grid steps
    BN = G * N                                    # folded node rows per step
    PAD = 8                                       # phy lanes appended to h slab

    # ----------------- layout plumbing (pure XLA glue) ----------------------
    xT = jnp.transpose(inputs_1.astype(f32), (0, 2, 3, 1)).reshape(NG, BN, DT)
    hT = jnp.transpose(h_input.astype(f32), (0, 2, 1)).reshape(NG, BN, Kh)
    inp2 = inputs_2.astype(f32)
    colsumT = jnp.transpose(jnp.sum(inp2, axis=2), (0, 2, 1)).reshape(NG, BN, T2)

    eyeG = jnp.eye(G, dtype=f32)
    # block-diagonal inputs_2 per grid step: (NG, T2, BN, BN)
    inp2_bd = jnp.einsum('agtnm,gc->atgncm',
                         inp2.reshape(NG, G, T2, N, N), eyeG).reshape(NG, T2, BN, BN)
    gall_bd = jnp.einsum('gc,nm->gncm', eyeG,
                         graph_all.astype(f32)).reshape(BN, BN)
    eye_bn = jnp.eye(BN, dtype=f32)
    sel = jnp.kron(eyeG, jnp.ones((1, N), f32))   # (G, BN) batch selector
    selT = sel.T                                  # (BN, G)

    out = pl.pallas_call(
        _phycell_kernel,
        out_shape=jax.ShapeDtypeStruct((NG, BN, Kh + PAD), f32),
        grid=(NG,),
        in_specs=[
            pl.BlockSpec((1, BN, DT), lambda a: (a, 0, 0)),
            pl.BlockSpec((1, T2, BN, BN), lambda a: (a, 0, 0, 0)),
            pl.BlockSpec((1, BN, T2), lambda a: (a, 0, 0)),
            pl.BlockSpec((1, BN, Kh), lambda a: (a, 0, 0)),
            pl.BlockSpec((BN, BN), lambda a: (0, 0)),        # gall_bd
            pl.BlockSpec((BN, BN), lambda a: (0, 0)),        # eye
            pl.BlockSpec((G, BN), lambda a: (0, 0)),         # sel
            pl.BlockSpec((BN, G), lambda a: (0, 0)),         # selT
            pl.BlockSpec((DT, T), lambda a: (0, 0)),         # waggT
            pl.BlockSpec((1, T), lambda a: (0, 0)),          # agg_b_row
            pl.BlockSpec((T, T), lambda a: (0, 0)),          # time_wT
            pl.BlockSpec((1, T), lambda a: (0, 0)),          # time_b_row
            pl.BlockSpec((T, T2), lambda a: (0, 0)),         # pairT
            pl.BlockSpec((Ks, DT, TC), lambda a: (0, 0, 0)),  # w_gcn
            pl.BlockSpec((1, TC), lambda a: (0, 0)),         # gcn_b_row
            pl.BlockSpec((TC, 3 * Kh), lambda a: (0, 0)),    # wiT
            pl.BlockSpec((Kh, 3 * Kh), lambda a: (0, 0)),    # whT
            pl.BlockSpec((1, 2 * Kh), lambda a: (0, 0)),     # b_rz
            pl.BlockSpec((1, Kh), lambda a: (0, 0)),         # b_in
            pl.BlockSpec((1, Kh), lambda a: (0, 0)),         # b_hn
            pl.BlockSpec((Kh, 2 * T2), lambda a: (0, 0)),    # awT
            pl.BlockSpec((1, 2 * T2), lambda a: (0, 0)),     # arr_b_row
        ],
        out_specs=pl.BlockSpec((1, BN, Kh + PAD), lambda a: (a, 0, 0)),
        compiler_params=pltpu.CompilerParams(
            dimension_semantics=("parallel",)),
    )(xT, inp2_bd, colsumT, hT, gall_bd, eye_bn, sel, selT,
      params["waggT"], params["agg_b_row"], params["time_wT"],
      params["time_b_row"], params["pairT"],
      params["w_gcn"], params["gcn_b_row"],
      params["wiT"], params["whT"], params["b_rz"], params["b_in"],
      params["b_hn"], params["awT"], params["arr_b_row"])

    out = out.reshape(B, N, Kh + PAD)
    h_new = out[:, :, :Kh]
    h1 = jnp.transpose(h_new.reshape(B, N, T2, H), (0, 2, 1, 3))   # (B, T2, N, H)
    phy = out[:, :, Kh]                                            # (B, N)
    return h1, phy


# ------------------------------ parameters ----------------------------------
def init_params(key, D, T, N, Ks, c_in, c_out, H):
    assert c_in == D and Ks >= 2
    T2 = T // 2
    Kh = T2 * H
    Kin = T * c_out
    ks = jax.random.split(key, 11)
    f32 = jnp.float32
    eyeT = jnp.eye(T, dtype=f32)
    eyeT2 = jnp.eye(T2, dtype=f32)

    # TimeAttention
    agg_w = jax.random.normal(ks[0], (D,), f32) / math.sqrt(D)
    agg_b = 0.01
    time_w = jax.random.normal(ks[1], (T, T), f32) / math.sqrt(T)
    time_b = 0.01 * jax.random.normal(ks[2], (T,), f32)
    idx = jnp.arange(T2)
    pair = (jnp.zeros((T2, T), f32)
            .at[idx, 2 * idx].set(1.0)
            .at[idx, 2 * idx + 1].set(1.0))

    # SpatioConvLayer
    bound_t = 1.0 / math.sqrt(c_in * Ks)
    theta = jax.random.uniform(ks[3], (c_in, c_out, Ks), f32, -bound_t, bound_t)
    gcn_b = jax.random.uniform(ks[4], (c_out,), f32, -bound_t, bound_t)

    # GRUCell (PyTorch gate order: r | z | n)
    bound_g = 1.0 / math.sqrt(Kh)
    W_ih = jax.random.uniform(ks[5], (3 * Kh, Kin), f32, -bound_g, bound_g)
    W_hh = jax.random.uniform(ks[6], (3 * Kh, Kh), f32, -bound_g, bound_g)
    b_ih = jax.random.uniform(ks[7], (3 * Kh,), f32, -bound_g, bound_g)
    b_hh = jax.random.uniform(ks[8], (3 * Kh,), f32, -bound_g, bound_g)

    # arr_linear
    bound_a = 1.0 / math.sqrt(H)
    arr_w = jax.random.uniform(ks[9], (2, H), f32, -bound_a, bound_a)
    arr_b = jax.random.uniform(ks[10], (2,), f32, -bound_a, bound_a)

    aw1 = jnp.einsum('h,ts->ths', arr_w[0], eyeT2).reshape(Kh, T2)
    aw2 = jnp.einsum('h,ts->ths', arr_w[1], eyeT2).reshape(Kh, T2)

    # ---- pre-expanded, matmul-ready forms consumed by the fused kernel -----
    return dict(
        waggT=jnp.einsum('i,ts->its', agg_w, eyeT).reshape(D * T, T),
        agg_b_row=jnp.full((1, T), agg_b, f32),
        time_wT=time_w.T,
        time_b_row=time_b.reshape(1, T),
        pairT=pair.T,
        w_gcn=jnp.einsum('iok,ts->kitso', theta, eyeT).reshape(Ks, c_in * T, T * c_out),
        gcn_b_row=jnp.tile(gcn_b, T).reshape(1, T * c_out),
        wiT=W_ih.T,
        whT=W_hh.T,
        b_rz=(b_ih[:2 * Kh] + b_hh[:2 * Kh]).reshape(1, 2 * Kh),
        b_in=b_ih[2 * Kh:].reshape(1, Kh),
        b_hn=b_hh[2 * Kh:].reshape(1, Kh),
        awT=jnp.concatenate([aw1, aw2], axis=1),                 # (Kh, 2*T2)
        arr_b_row=jnp.concatenate([jnp.full((T2,), arr_b[0], f32),
                                   jnp.full((T2,), arr_b[1], f32)]).reshape(1, 2 * T2),
    )


if __name__ == "__main__":
    B, T, N, D = 2, 8, 16, 4              # per_step=8, num_nodes=16, original_dim=4
    Ks, c_in, c_out, H = 3, 4, 8, 8       # gcn_ks, gcn_c_in, gcn_c_out, gru_h_dim
    T2, Kh = T // 2, (T // 2) * H

    key = jax.random.PRNGKey(0)
    k1, k2, k3, k4, kp = jax.random.split(key, 5)
    inputs_1 = jax.random.normal(k1, (B, T, N, D), jnp.float32)
    inputs_2 = jax.random.uniform(k2, (B, T2, N, N), jnp.float32)   # adjacency-like
    h_input = 0.1 * jax.random.normal(k3, (B, Kh, N), jnp.float32)
    graph_all = jax.random.uniform(k4, (N, N), jnp.float32)

    params = init_params(kp, D, T, N, Ks, c_in, c_out, H)

    fwd = jax.jit(phycell_forward)
    h1, phy = jax.block_until_ready(fwd(params, inputs_1, inputs_2, h_input, graph_all))

    assert h1.shape == (B, T2, N, H), h1.shape
    assert phy.shape == (B, N), phy.shape
    assert bool(jnp.all(jnp.isfinite(h1))) and bool(jnp.all(jnp.isfinite(phy)))
    print("KERNEL_OK")
</pallas_src>

<mosaic_0001>
module attributes {stable_mosaic.version = 11 : i64} {
  func.func @_phycell_kernel(%arg0: i32, %arg1: memref<1x32x32xf32, #tpu.memory_space<vmem>>, %arg2: memref<1x4x32x32xf32, #tpu.memory_space<vmem>>, %arg3: memref<1x32x4xf32, #tpu.memory_space<vmem>>, %arg4: memref<1x32x32xf32, #tpu.memory_space<vmem>>, %arg5: memref<32x32xf32, #tpu.memory_space<vmem>>, %arg6: memref<32x32xf32, #tpu.memory_space<vmem>>, %arg7: memref<2x32xf32, #tpu.memory_space<vmem>>, %arg8: memref<32x2xf32, #tpu.memory_space<vmem>>, %arg9: memref<32x8xf32, #tpu.memory_space<vmem>>, %arg10: memref<1x8xf32, #tpu.memory_space<vmem>>, %arg11: memref<8x8xf32, #tpu.memory_space<vmem>>, %arg12: memref<1x8xf32, #tpu.memory_space<vmem>>, %arg13: memref<8x4xf32, #tpu.memory_space<vmem>>, %arg14: memref<3x32x64xf32, #tpu.memory_space<vmem>>, %arg15: memref<1x64xf32, #tpu.memory_space<vmem>>, %arg16: memref<64x96xf32, #tpu.memory_space<vmem>>, %arg17: memref<32x96xf32, #tpu.memory_space<vmem>>, %arg18: memref<1x64xf32, #tpu.memory_space<vmem>>, %arg19: memref<1x32xf32, #tpu.memory_space<vmem>>, %arg20: memref<1x32xf32, #tpu.memory_space<vmem>>, %arg21: memref<32x8xf32, #tpu.memory_space<vmem>>, %arg22: memref<1x8xf32, #tpu.memory_space<vmem>>, %arg23: memref<1x32x40xf32, #tpu.memory_space<vmem>>) attributes {dimension_semantics = [#tpu.dimension_semantics<parallel>], iteration_bounds = array<i64: 1>, scalar_prefetch = 0 : i64, scratch_operands = 0 : i64, tpu.core_type = #tpu.core_type<tc>, window_params = [{transform_indices = @transform_0, window_bounds = array<i64: 1, 32, 32>}, {transform_indices = @transform_1, window_bounds = array<i64: 1, 4, 32, 32>}, {transform_indices = @transform_2, window_bounds = array<i64: 1, 32, 4>}, {transform_indices = @transform_3, window_bounds = array<i64: 1, 32, 32>}, {pipeline_mode = #tpu.pipeline_mode<synchronous>, transform_indices = @transform_4, window_bounds = array<i64: 32, 32>}, {pipeline_mode = #tpu.pipeline_mode<synchronous>, transform_indices = @transform_5, window_bounds = array<i64: 32, 32>}, {pipeline_mode = #tpu.pipeline_mode<synchronous>, transform_indices = @transform_6, window_bounds = array<i64: 2, 32>}, {pipeline_mode = #tpu.pipeline_mode<synchronous>, transform_indices = @transform_7, window_bounds = array<i64: 32, 2>}, {pipeline_mode = #tpu.pipeline_mode<synchronous>, transform_indices = @transform_8, window_bounds = array<i64: 32, 8>}, {pipeline_mode = #tpu.pipeline_mode<synchronous>, transform_indices = @transform_9, window_bounds = array<i64: 1, 8>}, {pipeline_mode = #tpu.pipeline_mode<synchronous>, transform_indices = @transform_10, window_bounds = array<i64: 8, 8>}, {pipeline_mode = #tpu.pipeline_mode<synchronous>, transform_indices = @transform_11, window_bounds = array<i64: 1, 8>}, {pipeline_mode = #tpu.pipeline_mode<synchronous>, transform_indices = @transform_12, window_bounds = array<i64: 8, 4>}, {pipeline_mode = #tpu.pipeline_mode<synchronous>, transform_indices = @transform_13, window_bounds = array<i64: 3, 32, 64>}, {pipeline_mode = #tpu.pipeline_mode<synchronous>, transform_indices = @transform_14, window_bounds = array<i64: 1, 64>}, {pipeline_mode = #tpu.pipeline_mode<synchronous>, transform_indices = @transform_15, window_bounds = array<i64: 64, 96>}, {pipeline_mode = #tpu.pipeline_mode<synchronous>, transform_indices = @transform_16, window_bounds = array<i64: 32, 96>}, {pipeline_mode = #tpu.pipeline_mode<synchronous>, transform_indices = @transform_17, window_bounds = array<i64: 1, 64>}, {pipeline_mode = #tpu.pipeline_mode<synchronous>, transform_indices = @transform_18, window_bounds = array<i64: 1, 32>}, {pipeline_mode = #tpu.pipeline_mode<synchronous>, transform_indices = @transform_19, window_bounds = array<i64: 1, 32>}, {pipeline_mode = #tpu.pipeline_mode<synchronous>, transform_indices = @transform_20, window_bounds = array<i64: 32, 8>}, {pipeline_mode = #tpu.pipeline_mode<synchronous>, transform_indices = @transform_21, window_bounds = array<i64: 1, 8>}, {transform_indices = @transform_22, window_bounds = array<i64: 1, 32, 40>}]} {
    %c0 = arith.constant 0 : index
    %c0_0 = arith.constant 0 : index
    %c0_1 = arith.constant 0 : index
    %0 = vector.load %arg1[%c0, %c0_0, %c0_1] : memref<1x32x32xf32, #tpu.memory_space<vmem>>, vector<1x32x32xf32>
    %1 = vector.shape_cast %0 : vector<1x32x32xf32> to vector<32x32xf32>
    %c0_2 = arith.constant 0 : index
    %c0_3 = arith.constant 0 : index
    %c0_4 = arith.constant 0 : index
    %2 = vector.load %arg4[%c0_2, %c0_3, %c0_4] : memref<1x32x32xf32, #tpu.memory_space<vmem>>, vector<1x32x32xf32>
    %3 = vector.shape_cast %2 : vector<1x32x32xf32> to vector<32x32xf32>
    %c0_5 = arith.constant 0 : index
    %c0_6 = arith.constant 0 : index
    %4 = vector.load %arg6[%c0_5, %c0_6] : memref<32x32xf32, #tpu.memory_space<vmem>>, vector<32x32xf32>
    %c0_7 = arith.constant 0 : index
    %c0_8 = arith.constant 0 : index
    %5 = vector.load %arg7[%c0_7, %c0_8] : memref<2x32xf32, #tpu.memory_space<vmem>>, vector<2x32xf32>
    %c0_9 = arith.constant 0 : index
    %c0_10 = arith.constant 0 : index
    %6 = vector.load %arg8[%c0_9, %c0_10] : memref<32x2xf32, #tpu.memory_space<vmem>>, vector<32x2xf32>
    %c0_11 = arith.constant 0 : index
    %c0_12 = arith.constant 0 : index
    %7 = vector.load %arg9[%c0_11, %c0_12] : memref<32x8xf32, #tpu.memory_space<vmem>>, vector<32x8xf32>
    %cst = arith.constant dense<0.000000e+00> : vector<32x8xf32>
    %8 = tpu.matmul %1, %7, %cst {dimension_numbers = #tpu.dot_dimension_numbers<[1], [0], [0], [1], [0, 0, 1, 1], [], []>} : vector<32x32xf32>, vector<32x8xf32>, vector<32x8xf32> -> vector<32x8xf32>
    %c0_13 = arith.constant 0 : index
    %c0_14 = arith.constant 0 : index
    %9 = vector.load %arg10[%c0_13, %c0_14] : memref<1x8xf32, #tpu.memory_space<vmem>>, vector<1x8xf32>
    %10 = vector.broadcast %9 : vector<1x8xf32> to vector<32x8xf32>
    %11 = arith.addf %8, %10 : vector<32x8xf32>
    %cst_15 = arith.constant 0.000000e+00 : f32
    %12 = vector.broadcast %cst_15 : f32 to vector<32x8xf32>
    %13 = arith.maximumf %11, %12 : vector<32x8xf32>
    %c0_16 = arith.constant 0 : index
    %c0_17 = arith.constant 0 : index
    %14 = vector.load %arg11[%c0_16, %c0_17] : memref<8x8xf32, #tpu.memory_space<vmem>>, vector<8x8xf32>
    %cst_18 = arith.constant dense<0.000000e+00> : vector<32x8xf32>
    %15 = tpu.matmul %13, %14, %cst_18 {dimension_numbers = #tpu.dot_dimension_numbers<[1], [0], [0], [1], [0, 0, 1, 1], [], []>} : vector<32x8xf32>, vector<8x8xf32>, vector<32x8xf32> -> vector<32x8xf32>
    %c0_19 = arith.constant 0 : index
    %c0_20 = arith.constant 0 : index
    %16 = vector.load %arg12[%c0_19, %c0_20] : memref<1x8xf32, #tpu.memory_space<vmem>>, vector<1x8xf32>
    %17 = vector.broadcast %16 : vector<1x8xf32> to vector<32x8xf32>
    %18 = arith.addf %15, %17 : vector<32x8xf32>
    %cst_21 = arith.constant dense<0xFF800000> : vector<32xf32>
    %19 = vector.multi_reduction <maximumf>, %18, %cst_21 [1] : vector<32x8xf32> to vector<32xf32>
    %20 = vector.shape_cast %19 : vector<32xf32> to vector<32x1xf32>
    %21 = vector.broadcast %20 : vector<32x1xf32> to vector<32x8xf32>
    %22 = arith.subf %18, %21 : vector<32x8xf32>
    %23 = math.exp %22 : vector<32x8xf32>
    %cst_22 = arith.constant dense<0.000000e+00> : vector<32xf32>
    %24 = vector.multi_reduction <add>, %23, %cst_22 [1] : vector<32x8xf32> to vector<32xf32>
    %25 = vector.shape_cast %24 : vector<32xf32> to vector<32x1xf32>
    %26 = tpu.reciprocal %25 {approx = true} : vector<32x1xf32> -> vector<32x1xf32>
    %27 = vector.broadcast %26 : vector<32x1xf32> to vector<32x8xf32>
    %28 = arith.mulf %23, %27 : vector<32x8xf32>
    %c0_23 = arith.constant 0 : index
    %c0_24 = arith.constant 0 : index
    %29 = vector.load %arg13[%c0_23, %c0_24] : memref<8x4xf32, #tpu.memory_space<vmem>>, vector<8x4xf32>
    %cst_25 = arith.constant dense<0.000000e+00> : vector<32x4xf32>
    %30 = tpu.matmul %28, %29, %cst_25 {dimension_numbers = #tpu.dot_dimension_numbers<[1], [0], [0], [1], [0, 0, 1, 1], [], []>} : vector<32x8xf32>, vector<8x4xf32>, vector<32x4xf32> -> vector<32x4xf32>
    %31 = vector.extract_strided_slice %30 {offsets = [0, 0], sizes = [32, 1], strides = [1, 1]} : vector<32x4xf32> to vector<32x1xf32>
    %c0_26 = arith.constant 0 : index
    %c0_27 = arith.constant 0 : index
    %c0_28 = arith.constant 0 : index
    %c0_29 = arith.constant 0 : index
    %32 = vector.load %arg2[%c0_26, %c0_27, %c0_28, %c0_29] : memref<1x4x32x32xf32, #tpu.memory_space<vmem>>, vector<1x1x32x32xf32>
    %33 = vector.shape_cast %32 : vector<1x1x32x32xf32> to vector<32x32xf32>
    %34 = vector.broadcast %31 : vector<32x1xf32> to vector<32x32xf32>
    %35 = arith.mulf %34, %33 : vector<32x32xf32>
    %36 = vector.extract_strided_slice %30 {offsets = [0, 1], sizes = [32, 1], strides = [1, 1]} : vector<32x4xf32> to vector<32x1xf32>
    %c0_30 = arith.constant 0 : index
    %c1 = arith.constant 1 : index
    %c0_31 = arith.constant 0 : index
    %c0_32 = arith.constant 0 : index
    %37 = vector.load %arg2[%c0_30, %c1, %c0_31, %c0_32] : memref<1x4x32x32xf32, #tpu.memory_space<vmem>>, vector<1x1x32x32xf32>
    %38 = vector.shape_cast %37 : vector<1x1x32x32xf32> to vector<32x32xf32>
    %39 = vector.broadcast %36 : vector<32x1xf32> to vector<32x32xf32>
    %40 = arith.mulf %39, %38 : vector<32x32xf32>
    %41 = arith.addf %35, %40 : vector<32x32xf32>
    %42 = vector.extract_strided_slice %30 {offsets = [0, 2], sizes = [32, 1], strides = [1, 1]} : vector<32x4xf32> to vector<32x1xf32>
    %c0_33 = arith.constant 0 : index
    %c2 = arith.constant 2 : index
    %c0_34 = arith.constant 0 : index
    %c0_35 = arith.constant 0 : index
    %43 = vector.load %arg2[%c0_33, %c2, %c0_34, %c0_35] : memref<1x4x32x32xf32, #tpu.memory_space<vmem>>, vector<1x1x32x32xf32>
    %44 = vector.shape_cast %43 : vector<1x1x32x32xf32> to vector<32x32xf32>
    %45 = vector.broadcast %42 : vector<32x1xf32> to vector<32x32xf32>
    %46 = arith.mulf %45, %44 : vector<32x32xf32>
    %47 = arith.addf %41, %46 : vector<32x32xf32>
    %48 = vector.extract_strided_slice %30 {offsets = [0, 3], sizes = [32, 1], strides = [1, 1]} : vector<32x4xf32> to vector<32x1xf32>
    %c0_36 = arith.constant 0 : index
    %c3 = arith.constant 3 : index
    %c0_37 = arith.constant 0 : index
    %c0_38 = arith.constant 0 : index
    %49 = vector.load %arg2[%c0_36, %c3, %c0_37, %c0_38] : memref<1x4x32x32xf32, #tpu.memory_space<vmem>>, vector<1x1x32x32xf32>
    %50 = vector.shape_cast %49 : vector<1x1x32x32xf32> to vector<32x32xf32>
    %51 = vector.broadcast %48 : vector<32x1xf32> to vector<32x32xf32>
    %52 = arith.mulf %51, %50 : vector<32x32xf32>
    %53 = arith.addf %47, %52 : vector<32x32xf32>
    %54 = math.absf %53 : vector<32x32xf32>
    %cst_39 = arith.constant dense<0.000000e+00> : vector<32xf32>
    %55 = vector.multi_reduction <add>, %54, %cst_39 [0] : vector<32x32xf32> to vector<32xf32>
    %56 = vector.shape_cast %55 : vector<32xf32> to vector<1x32xf32>
    %cst_40 = arith.constant 9.99999996E-13 : f32
    %57 = vector.broadcast %cst_40 : f32 to vector<1x32xf32>
    %58 = arith.maximumf %56, %57 : vector<1x32xf32>
    %59 = tpu.reciprocal %58 {approx = true} : vector<1x32xf32> -> vector<1x32xf32>
    %60 = vector.broadcast %59 : vector<1x32xf32> to vector<32x32xf32>
    %61 = arith.mulf %53, %60 : vector<32x32xf32>
    %62 = arith.addf %61, %4 : vector<32x32xf32>
    %c0_41 = arith.constant 0 : index
    %c0_42 = arith.constant 0 : index
    %63 = vector.load %arg5[%c0_41, %c0_42] : memref<32x32xf32, #tpu.memory_space<vmem>>, vector<32x32xf32>
    %64 = arith.addf %62, %63 : vector<32x32xf32>
    %cst_43 = arith.constant dense<0.000000e+00> : vector<32xf32>
    %65 = vector.multi_reduction <add>, %64, %cst_43 [1] : vector<32x32xf32> to vector<32xf32>
    %66 = vector.shape_cast %65 : vector<32xf32> to vector<32x1xf32>
    %cst_44 = arith.constant 0.000000e+00 : f32
    %67 = vector.broadcast %cst_44 : f32 to vector<32x32xf32>
    %68 = arith.subf %67, %64 : vector<32x32xf32>
    %cst_45 = arith.constant 1.000000e+00 : f32
    %69 = vector.broadcast %cst_45 : f32 to vector<32x32xf32>
    %70 = arith.subf %69, %4 : vector<32x32xf32>
    %71 = arith.mulf %68, %70 : vector<32x32xf32>
    %72 = vector.broadcast %66 : vector<32x1xf32> to vector<32x32xf32>
    %73 = arith.mulf %4, %72 : vector<32x32xf32>
    %74 = arith.addf %71, %73 : vector<32x32xf32>
    %75 = math.rsqrt %66 : vector<32x1xf32>
    %76 = vector.broadcast %75 : vector<32x1xf32> to vector<32x32xf32>
    %77 = arith.mulf %76, %74 : vector<32x32xf32>
    %78 = vector.broadcast %75 : vector<32x1xf32> to vector<32x32xf32>
    %79 = arith.mulf %4, %78 : vector<32x32xf32>
    %cst_46 = arith.constant dense<0.000000e+00> : vector<32x32xf32>
    %80 = tpu.matmul %77, %79, %cst_46 {dimension_numbers = #tpu.dot_dimension_numbers<[1], [0], [0], [1], [0, 0, 1, 1], [], []>} : vector<32x32xf32>, vector<32x32xf32>, vector<32x32xf32> -> vector<32x32xf32>
    %cst_47 = arith.constant dense<0.000000e+00> : vector<32x32xf32>
    %81 = tpu.matmul %80, %80, %cst_47 {dimension_numbers = #tpu.dot_dimension_numbers<[1], [0], [0], [1], [0, 0, 1, 1], [], []>} : vector<32x32xf32>, vector<32x32xf32>, vector<32x32xf32> -> vector<32x32xf32>
    %cst_48 = arith.constant dense<0.000000e+00> : vector<32x32xf32>
    %82 = tpu.matmul %81, %81, %cst_48 {dimension_numbers = #tpu.dot_dimension_numbers<[1], [0], [0], [1], [0, 0, 1, 1], [], []>} : vector<32x32xf32>, vector<32x32xf32>, vector<32x32xf32> -> vector<32x32xf32>
    %cst_49 = arith.constant dense<0.000000e+00> : vector<32x32xf32>
    %83 = tpu.matmul %82, %82, %cst_49 {dimension_numbers = #tpu.dot_dimension_numbers<[1], [0], [0], [1], [0, 0, 1, 1], [], []>} : vector<32x32xf32>, vector<32x32xf32>, vector<32x32xf32> -> vector<32x32xf32>
    %cst_50 = arith.constant dense<0.000000e+00> : vector<32x32xf32>
    %84 = tpu.matmul %83, %83, %cst_50 {dimension_numbers = #tpu.dot_dimension_numbers<[1], [0], [0], [1], [0, 0, 1, 1], [], []>} : vector<32x32xf32>, vector<32x32xf32>, vector<32x32xf32> -> vector<32x32xf32>
    %cst_51 = arith.constant dense<0.000000e+00> : vector<32x32xf32>
    %85 = tpu.matmul %84, %84, %cst_51 {dimension_numbers = #tpu.dot_dimension_numbers<[1], [0], [0], [1], [0, 0, 1, 1], [], []>} : vector<32x32xf32>, vector<32x32xf32>, vector<32x32xf32> -> vector<32x32xf32>
    %cst_52 = arith.constant dense<0.000000e+00> : vector<2x32xf32>
    %86 = tpu.matmul %5, %85, %cst_52 {dimension_numbers = #tpu.dot_dimension_numbers<[1], [0], [0], [1], [0, 0, 1, 1], [], []>} : vector<2x32xf32>, vector<32x32xf32>, vector<2x32xf32> -> vector<2x32xf32>
    %cst_53 = arith.constant dense<0.000000e+00> : vector<2x32xf32>
    %87 = tpu.matmul %86, %80, %cst_53 {dimension_numbers = #tpu.dot_dimension_numbers<[1], [0], [0], [1], [0, 0, 1, 1], [], []>} : vector<2x32xf32>, vector<32x32xf32>, vector<2x32xf32> -> vector<2x32xf32>
    %88 = arith.mulf %87, %86 : vector<2x32xf32>
    %cst_54 = arith.constant dense<0.000000e+00> : vector<2xf32>
    %89 = vector.multi_reduction <add>, %88, %cst_54 [1] : vector<2x32xf32> to vector<2xf32>
    %90 = vector.shape_cast %89 : vector<2xf32> to vector<2x1xf32>
    %91 = arith.mulf %86, %86 : vector<2x32xf32>
    %cst_55 = arith.constant dense<0.000000e+00> : vector<2xf32>
    %92 = vector.multi_reduction <add>, %91, %cst_55 [1] : vector<2x32xf32> to vector<2xf32>
    %93 = vector.shape_cast %92 : vector<2xf32> to vector<2x1xf32>
    %cst_56 = arith.constant 9.99999996E-13 : f32
    %94 = vector.broadcast %cst_56 : f32 to vector<2x1xf32>
    %95 = arith.addf %93, %94 : vector<2x1xf32>
    %96 = tpu.reciprocal %95 {approx = true} : vector<2x1xf32> -> vector<2x1xf32>
    %97 = arith.mulf %90, %96 : vector<2x1xf32>
    %98 = math.absf %97 : vector<2x1xf32>
    %cst_57 = arith.constant 9.99999997E-7 : f32
    %99 = vector.broadcast %cst_57 : f32 to vector<2x1xf32>
    %100 = arith.cmpf olt, %98, %99 : vector<2x1xf32>
    %cst_58 = arith.constant 0.000000e+00 : f32
    %101 = vector.broadcast %cst_58 : f32 to vector<2x1xf32>
    %102 = arith.cmpf olt, %97, %101 : vector<2x1xf32>
    %cst_59 = arith.constant -9.99999997E-7 : f32
    %cst_60 = arith.constant 9.99999997E-7 : f32
    %103 = vector.broadcast %cst_59 : f32 to vector<2x1xf32>
    %104 = vector.broadcast %cst_60 : f32 to vector<2x1xf32>
    %105 = arith.select %102, %103, %104 : vector<2x1xi1>, vector<2x1xf32>
    %106 = arith.select %100, %105, %97 : vector<2x1xi1>, vector<2x1xf32>
    %107 = tpu.reciprocal %106 {approx = true} : vector<2x1xf32> -> vector<2x1xf32>
    %cst_61 = arith.constant 2.000000e+00 : f32
    %108 = vector.broadcast %cst_61 : f32 to vector<2x1xf32>
    %109 = arith.mulf %108, %107 : vector<2x1xf32>
    %cst_62 = arith.constant dense<0.000000e+00> : vector<32x1xf32>
    %110 = tpu.matmul %6, %109, %cst_62 {dimension_numbers = #tpu.dot_dimension_numbers<[1], [0], [0], [1], [0, 0, 1, 1], [], []>} : vector<32x2xf32>, vector<2x1xf32>, vector<32x1xf32> -> vector<32x1xf32>
    %111 = vector.broadcast %110 : vector<32x1xf32> to vector<32x32xf32>
    %112 = arith.mulf %80, %111 : vector<32x32xf32>
    %113 = arith.subf %112, %4 : vector<32x32xf32>
    %c0_63 = arith.constant 0 : index
    %c0_64 = arith.constant 0 : index
    %c0_65 = arith.constant 0 : index
    %114 = vector.load %arg14[%c0_63, %c0_64, %c0_65] : memref<3x32x64xf32, #tpu.memory_space<vmem>>, vector<1x32x64xf32>
    %115 = vector.shape_cast %114 : vector<1x32x64xf32> to vector<32x64xf32>
    %cst_66 = arith.constant dense<0.000000e+00> : vector<32x64xf32>
    %116 = tpu.matmul %1, %115, %cst_66 {dimension_numbers = #tpu.dot_dimension_numbers<[1], [0], [0], [1], [0, 0, 1, 1], [], []>} : vector<32x32xf32>, vector<32x64xf32>, vector<32x64xf32> -> vector<32x64xf32>
    %cst_67 = arith.constant dense<0.000000e+00> : vector<32x32xf32>
    %117 = tpu.matmul %113, %1, %cst_67 {dimension_numbers = #tpu.dot_dimension_numbers<[1], [0], [0], [1], [0, 0, 1, 1], [], []>} : vector<32x32xf32>, vector<32x32xf32>, vector<32x32xf32> -> vector<32x32xf32>
    %c1_68 = arith.constant 1 : index
    %c0_69 = arith.constant 0 : index
    %c0_70 = arith.constant 0 : index
    %118 = vector.load %arg14[%c1_68, %c0_69, %c0_70] : memref<3x32x64xf32, #tpu.memory_space<vmem>>, vector<1x32x64xf32>
    %119 = vector.shape_cast %118 : vector<1x32x64xf32> to vector<32x64xf32>
    %cst_71 = arith.constant dense<0.000000e+00> : vector<32x64xf32>
    %120 = tpu.matmul %117, %119, %cst_71 {dimension_numbers = #tpu.dot_dimension_numbers<[1], [0], [0], [1], [0, 0, 1, 1], [], []>} : vector<32x32xf32>, vector<32x64xf32>, vector<32x64xf32> -> vector<32x64xf32>
    %121 = arith.addf %116, %120 : vector<32x64xf32>
    %cst_72 = arith.constant dense<0.000000e+00> : vector<32x32xf32>
    %122 = tpu.matmul %113, %117, %cst_72 {dimension_numbers = #tpu.dot_dimension_numbers<[1], [0], [0], [1], [0, 0, 1, 1], [], []>} : vector<32x32xf32>, vector<32x32xf32>, vector<32x32xf32> -> vector<32x32xf32>
    %cst_73 = arith.constant 2.000000e+00 : f32
    %123 = vector.broadcast %cst_73 : f32 to vector<32x32xf32>
    %124 = arith.mulf %123, %122 : vector<32x32xf32>
    %125 = arith.subf %124, %1 : vector<32x32xf32>
    %c2_74 = arith.constant 2 : index
    %c0_75 = arith.constant 0 : index
    %c0_76 = arith.constant 0 : index
    %126 = vector.load %arg14[%c2_74, %c0_75, %c0_76] : memref<3x32x64xf32, #tpu.memory_space<vmem>>, vector<1x32x64xf32>
    %127 = vector.shape_cast %126 : vector<1x32x64xf32> to vector<32x64xf32>
    %cst_77 = arith.constant dense<0.000000e+00> : vector<32x64xf32>
    %128 = tpu.matmul %125, %127, %cst_77 {dimension_numbers = #tpu.dot_dimension_numbers<[1], [0], [0], [1], [0, 0, 1, 1], [], []>} : vector<32x32xf32>, vector<32x64xf32>, vector<32x64xf32> -> vector<32x64xf32>
    %129 = arith.addf %121, %128 : vector<32x64xf32>
    %c0_78 = arith.constant 0 : index
    %c0_79 = arith.constant 0 : index
    %130 = vector.load %arg15[%c0_78, %c0_79] : memref<1x64xf32, #tpu.memory_space<vmem>>, vector<1x64xf32>
    %131 = vector.broadcast %130 : vector<1x64xf32> to vector<32x64xf32>
    %132 = arith.addf %129, %131 : vector<32x64xf32>
    %cst_80 = arith.constant 0.000000e+00 : f32
    %133 = vector.broadcast %cst_80 : f32 to vector<32x64xf32>
    %134 = arith.maximumf %132, %133 : vector<32x64xf32>
    %c0_81 = arith.constant 0 : index
    %c0_82 = arith.constant 0 : index
    %135 = vector.load %arg16[%c0_81, %c0_82] : memref<64x96xf32, #tpu.memory_space<vmem>>, vector<64x96xf32>
    %cst_83 = arith.constant dense<0.000000e+00> : vector<32x96xf32>
    %136 = tpu.matmul %134, %135, %cst_83 {dimension_numbers = #tpu.dot_dimension_numbers<[1], [0], [0], [1], [0, 0, 1, 1], [], []>} : vector<32x64xf32>, vector<64x96xf32>, vector<32x96xf32> -> vector<32x96xf32>
    %c0_84 = arith.constant 0 : index
    %c0_85 = arith.constant 0 : index
    %137 = vector.load %arg17[%c0_84, %c0_85] : memref<32x96xf32, #tpu.memory_space<vmem>>, vector<32x96xf32>
    %cst_86 = arith.constant dense<0.000000e+00> : vector<32x96xf32>
    %138 = tpu.matmul %3, %137, %cst_86 {dimension_numbers = #tpu.dot_dimension_numbers<[1], [0], [0], [1], [0, 0, 1, 1], [], []>} : vector<32x32xf32>, vector<32x96xf32>, vector<32x96xf32> -> vector<32x96xf32>
    %139 = vector.extract_strided_slice %136 {offsets = [0, 0], sizes = [32, 64], strides = [1, 1]} : vector<32x96xf32> to vector<32x64xf32>
    %140 = vector.extract_strided_slice %138 {offsets = [0, 0], sizes = [32, 64], strides = [1, 1]} : vector<32x96xf32> to vector<32x64xf32>
    %141 = arith.addf %139, %140 : vector<32x64xf32>
    %c0_87 = arith.constant 0 : index
    %c0_88 = arith.constant 0 : index
    %142 = vector.load %arg18[%c0_87, %c0_88] : memref<1x64xf32, #tpu.memory_space<vmem>>, vector<1x64xf32>
    %143 = vector.broadcast %142 : vector<1x64xf32> to vector<32x64xf32>
    %144 = arith.addf %141, %143 : vector<32x64xf32>
    %145 = arith.negf %144 : vector<32x64xf32>
    %146 = math.exp %145 : vector<32x64xf32>
    %cst_89 = arith.constant 1.000000e+00 : f32
    %147 = vector.broadcast %cst_89 : f32 to vector<32x64xf32>
    %148 = arith.addf %147, %146 : vector<32x64xf32>
    %149 = arith.divf %147, %148 : vector<32x64xf32>
    %150 = vector.extract_strided_slice %149 {offsets = [0, 0], sizes = [32, 32], strides = [1, 1]} : vector<32x64xf32> to vector<32x32xf32>
    %151 = vector.extract_strided_slice %149 {offsets = [0, 32], sizes = [32, 32], strides = [1, 1]} : vector<32x64xf32> to vector<32x32xf32>
    %152 = vector.extract_strided_slice %136 {offsets = [0, 64], sizes = [32, 32], strides = [1, 1]} : vector<32x96xf32> to vector<32x32xf32>
    %c0_90 = arith.constant 0 : index
    %c0_91 = arith.constant 0 : index
    %153 = vector.load %arg19[%c0_90, %c0_91] : memref<1x32xf32, #tpu.memory_space<vmem>>, vector<1x32xf32>
    %154 = vector.broadcast %153 : vector<1x32xf32> to vector<32x32xf32>
    %155 = arith.addf %152, %154 : vector<32x32xf32>
    %156 = vector.extract_strided_slice %138 {offsets = [0, 64], sizes = [32, 32], strides = [1, 1]} : vector<32x96xf32> to vector<32x32xf32>
    %c0_92 = arith.constant 0 : index
    %c0_93 = arith.constant 0 : index
    %157 = vector.load %arg20[%c0_92, %c0_93] : memref<1x32xf32, #tpu.memory_space<vmem>>, vector<1x32xf32>
    %158 = vector.broadcast %157 : vector<1x32xf32> to vector<32x32xf32>
    %159 = arith.addf %156, %158 : vector<32x32xf32>
    %160 = arith.mulf %150, %159 : vector<32x32xf32>
    %161 = arith.addf %155, %160 : vector<32x32xf32>
    %162 = math.tanh %161 : vector<32x32xf32>
    %cst_94 = arith.constant 1.000000e+00 : f32
    %163 = vector.broadcast %cst_94 : f32 to vector<32x32xf32>
    %164 = arith.subf %163, %151 : vector<32x32xf32>
    %165 = arith.mulf %164, %162 : vector<32x32xf32>
    %166 = arith.mulf %151, %3 : vector<32x32xf32>
    %167 = arith.addf %165, %166 : vector<32x32xf32>
    %c0_95 = arith.constant 0 : index
    %c0_96 = arith.constant 0 : index
    %168 = vector.load %arg21[%c0_95, %c0_96] : memref<32x8xf32, #tpu.memory_space<vmem>>, vector<32x8xf32>
    %cst_97 = arith.constant dense<0.000000e+00> : vector<32x8xf32>
    %169 = tpu.matmul %167, %168, %cst_97 {dimension_numbers = #tpu.dot_dimension_numbers<[1], [0], [0], [1], [0, 0, 1, 1], [], []>} : vector<32x32xf32>, vector<32x8xf32>, vector<32x8xf32> -> vector<32x8xf32>
    %c0_98 = arith.constant 0 : index
    %c0_99 = arith.constant 0 : index
    %170 = vector.load %arg22[%c0_98, %c0_99] : memref<1x8xf32, #tpu.memory_space<vmem>>, vector<1x8xf32>
    %171 = vector.broadcast %170 : vector<1x8xf32> to vector<32x8xf32>
    %172 = arith.addf %169, %171 : vector<32x8xf32>
    %173 = arith.negf %172 : vector<32x8xf32>
    %174 = math.exp %173 : vector<32x8xf32>
    %cst_100 = arith.constant 1.000000e+00 : f32
    %175 = vector.broadcast %cst_100 : f32 to vector<32x8xf32>
    %176 = arith.addf %175, %174 : vector<32x8xf32>
    %177 = arith.divf %175, %176 : vector<32x8xf32>
    %178 = vector.extract_strided_slice %177 {offsets = [0, 0], sizes = [32, 4], strides = [1, 1]} : vector<32x8xf32> to vector<32x4xf32>
    %179 = vector.extract_strided_slice %177 {offsets = [0, 4], sizes = [32, 4], strides = [1, 1]} : vector<32x8xf32> to vector<32x4xf32>
    %c0_101 = arith.constant 0 : index
    %c0_102 = arith.constant 0 : index
    %c0_103 = arith.constant 0 : index
    %180 = vector.load %arg3[%c0_101, %c0_102, %c0_103] : memref<1x32x4xf32, #tpu.memory_space<vmem>>, vector<1x32x4xf32>
    %181 = vector.shape_cast %180 : vector<1x32x4xf32> to vector<32x4xf32>
    %182 = arith.mulf %181, %178 : vector<32x4xf32>
    %cst_104 = arith.constant dense<0.000000e+00> : vector<2x4xf32>
    %183 = tpu.matmul %5, %182, %cst_104 {dimension_numbers = #tpu.dot_dimension_numbers<[1], [0], [0], [1], [0, 0, 1, 1], [], []>} : vector<2x32xf32>, vector<32x4xf32>, vector<2x4xf32> -> vector<2x4xf32>
    %cst_105 = arith.constant dense<0.000000e+00> : vector<32x4xf32>
    %184 = tpu.matmul %6, %183, %cst_105 {dimension_numbers = #tpu.dot_dimension_numbers<[1], [0], [0], [1], [0, 0, 1, 1], [], []>} : vector<32x2xf32>, vector<2x4xf32>, vector<32x4xf32> -> vector<32x4xf32>
    %185 = arith.mulf %179, %184 : vector<32x4xf32>
    %cst_106 = arith.constant dense<0.000000e+00> : vector<32xf32>
    %186 = vector.multi_reduction <add>, %185, %cst_106 [1] : vector<32x4xf32> to vector<32xf32>
    %187 = vector.shape_cast %186 : vector<32xf32> to vector<32x1xf32>
    %c0_107 = arith.constant 0 : index
    %c0_108 = arith.constant 0 : index
    %c0_109 = arith.constant 0 : index
    %188 = vector.load %arg23[%c0_107, %c0_108, %c0_109] : memref<1x32x40xf32, #tpu.memory_space<vmem>>, vector<1x32x32xf32>
    %189 = vector.shape_cast %188 : vector<1x32x32xf32> to vector<32x32xf32>
    %190 = vector.shape_cast %167 : vector<32x32xf32> to vector<1x32x32xf32>
    tpu.vector_store %arg23[%c0_107, %c0_108, %c0_109], %190 {strides = array<i32>} : memref<1x32x40xf32, #tpu.memory_space<vmem>>, vector<1x32x32xf32>,
    %191 = vector.shape_cast %187 : vector<32x1xf32> to vector<32x1xf32>
    %192 = vector.broadcast %191 : vector<32x1xf32> to vector<32x8xf32>
    %c0_110 = arith.constant 0 : index
    %c0_111 = arith.constant 0 : index
    %c32 = arith.constant 32 : index
    %193 = vector.load %arg23[%c0_110, %c0_111, %c32] : memref<1x32x40xf32, #tpu.memory_space<vmem>>, vector<1x32x8xf32>
    %194 = vector.shape_cast %193 : vector<1x32x8xf32> to vector<32x8xf32>
    %195 = vector.shape_cast %192 : vector<32x8xf32> to vector<1x32x8xf32>
    tpu.vector_store %arg23[%c0_110, %c0_111, %c32], %195 {strides = array<i32>} : memref<1x32x40xf32, #tpu.memory_space<vmem>>, vector<1x32x8xf32>,
    return
  }
  func.func @transform_0(%arg0: i32) -> (i32, i32, i32) {
    %c0_i32 = arith.constant 0 : i32
    %c0_i32_0 = arith.constant 0 : i32
    %c0_i32_1 = arith.constant 0 : i32
    return %arg0, %c0_i32, %c0_i32_0 : i32, i32, i32
  }
  func.func @transform_1(%arg0: i32) -> (i32, i32, i32, i32) {
    %c0_i32 = arith.constant 0 : i32
    %c0_i32_0 = arith.constant 0 : i32
    %c0_i32_1 = arith.constant 0 : i32
    %c0_i32_2 = arith.constant 0 : i32
    return %arg0, %c0_i32, %c0_i32_0, %c0_i32_1 : i32, i32, i32, i32
  }
  func.func @transform_2(%arg0: i32) -> (i32, i32, i32) {
    %c0_i32 = arith.constant 0 : i32
    %c0_i32_0 = arith.constant 0 : i32
    %c0_i32_1 = arith.constant 0 : i32
    return %arg0, %c0_i32, %c0_i32_0 : i32, i32, i32
  }
  func.func @transform_3(%arg0: i32) -> (i32, i32, i32) {
    %c0_i32 = arith.constant 0 : i32
    %c0_i32_0 = arith.constant 0 : i32
    %c0_i32_1 = arith.constant 0 : i32
    return %arg0, %c0_i32, %c0_i32_0 : i32, i32, i32
  }
  func.func @transform_4(%arg0: i32) -> (i32, i32) {
    %c0_i32 = arith.constant 0 : i32
    %c0_i32_0 = arith.constant 0 : i32
    %c0_i32_1 = arith.constant 0 : i32
    return %c0_i32, %c0_i32_0 : i32, i32
  }
  func.func @transform_5(%arg0: i32) -> (i32, i32) {
    %c0_i32 = arith.constant 0 : i32
    %c0_i32_0 = arith.constant 0 : i32
    %c0_i32_1 = arith.constant 0 : i32
    return %c0_i32, %c0_i32_0 : i32, i32
  }
  func.func @transform_6(%arg0: i32) -> (i32, i32) {
    %c0_i32 = arith.constant 0 : i32
    %c0_i32_0 = arith.constant 0 : i32
    %c0_i32_1 = arith.constant 0 : i32
    return %c0_i32, %c0_i32_0 : i32, i32
  }
  func.func @transform_7(%arg0: i32) -> (i32, i32) {
    %c0_i32 = arith.constant 0 : i32
    %c0_i32_0 = arith.constant 0 : i32
    %c0_i32_1 = arith.constant 0 : i32
    return %c0_i32, %c0_i32_0 : i32, i32
  }
  func.func @transform_8(%arg0: i32) -> (i32, i32) {
    %c0_i32 = arith.constant 0 : i32
    %c0_i32_0 = arith.constant 0 : i32
    %c0_i32_1 = arith.constant 0 : i32
    return %c0_i32, %c0_i32_0 : i32, i32
  }
  func.func @transform_9(%arg0: i32) -> (i32, i32) {
    %c0_i32 = arith.constant 0 : i32
    %c0_i32_0 = arith.constant 0 : i32
    %c0_i32_1 = arith.constant 0 : i32
    return %c0_i32, %c0_i32_0 : i32, i32
  }
  func.func @transform_10(%arg0: i32) -> (i32, i32) {
    %c0_i32 = arith.constant 0 : i32
    %c0_i32_0 = arith.constant 0 : i32
    %c0_i32_1 = arith.constant 0 : i32
    return %c0_i32, %c0_i32_0 : i32, i32
  }
  func.func @transform_11(%arg0: i32) -> (i32, i32) {
    %c0_i32 = arith.constant 0 : i32
    %c0_i32_0 = arith.constant 0 : i32
    %c0_i32_1 = arith.constant 0 : i32
    return %c0_i32, %c0_i32_0 : i32, i32
  }
  func.func @transform_12(%arg0: i32) -> (i32, i32) {
    %c0_i32 = arith.constant 0 : i32
    %c0_i32_0 = arith.constant 0 : i32
    %c0_i32_1 = arith.constant 0 : i32
    return %c0_i32, %c0_i32_0 : i32, i32
  }
  func.func @transform_13(%arg0: i32) -> (i32, i32, i32) {
    %c0_i32 = arith.constant 0 : i32
    %c0_i32_0 = arith.constant 0 : i32
    %c0_i32_1 = arith.constant 0 : i32
    %c0_i32_2 = arith.constant 0 : i32
    return %c0_i32, %c0_i32_0, %c0_i32_1 : i32, i32, i32
  }
  func.func @transform_14(%arg0: i32) -> (i32, i32) {
    %c0_i32 = arith.constant 0 : i32
    %c0_i32_0 = arith.constant 0 : i32
    %c0_i32_1 = arith.constant 0 : i32
    return %c0_i32, %c0_i32_0 : i32, i32
  }
  func.func @transform_15(%arg0: i32) -> (i32, i32) {
    %c0_i32 = arith.constant 0 : i32
    %c0_i32_0 = arith.constant 0 : i32
    %c0_i32_1 = arith.constant 0 : i32
    return %c0_i32, %c0_i32_0 : i32, i32
  }
  func.func @transform_16(%arg0: i32) -> (i32, i32) {
    %c0_i32 = arith.constant 0 : i32
    %c0_i32_0 = arith.constant 0 : i32
    %c0_i32_1 = arith.constant 0 : i32
    return %c0_i32, %c0_i32_0 : i32, i32
  }
  func.func @transform_17(%arg0: i32) -> (i32, i32) {
    %c0_i32 = arith.constant 0 : i32
    %c0_i32_0 = arith.constant 0 : i32
    %c0_i32_1 = arith.constant 0 : i32
    return %c0_i32, %c0_i32_0 : i32, i32
  }
  func.func @transform_18(%arg0: i32) -> (i32, i32) {
    %c0_i32 = arith.constant 0 : i32
    %c0_i32_0 = arith.constant 0 : i32
    %c0_i32_1 = arith.constant 0 : i32
    return %c0_i32, %c0_i32_0 : i32, i32
  }
  func.func @transform_19(%arg0: i32) -> (i32, i32) {
    %c0_i32 = arith.constant 0 : i32
    %c0_i32_0 = arith.constant 0 : i32
    %c0_i32_1 = arith.constant 0 : i32
    return %c0_i32, %c0_i32_0 : i32, i32
  }
  func.func @transform_20(%arg0: i32) -> (i32, i32) {
    %c0_i32 = arith.constant 0 : i32
    %c0_i32_0 = arith.constant 0 : i32
    %c0_i32_1 = arith.constant 0 : i32
    return %c0_i32, %c0_i32_0 : i32, i32
  }
  func.func @transform_21(%arg0: i32) -> (i32, i32) {
    %c0_i32 = arith.constant 0 : i32
    %c0_i32_0 = arith.constant 0 : i32
    %c0_i32_1 = arith.constant 0 : i32
    return %c0_i32, %c0_i32_0 : i32, i32
  }
  func.func @transform_22(%arg0: i32) -> (i32, i32, i32) {
    %c0_i32 = arith.constant 0 : i32
    %c0_i32_0 = arith.constant 0 : i32
    %c0_i32_1 = arith.constant 0 : i32
    return %arg0, %c0_i32, %c0_i32_0 : i32, i32, i32
  }
}

</mosaic_0001>

<llo_original>
// kernel: phycell_forward.1
$region0: #{phycell_forward.1}
  #allocation0 [shape = 'u32[]', space=smem, size = 0x4, offset = 0x4, fixed_abs, tag = 'smem constant byte address 0x4 - core index']
  #allocation1 [shape = 'u32[72,128]{1,0:T(1,128)}', space=vmem, size = 0x9000, scoped, tag = 'internal scratch']
  %s0 = inlined_call_operand.vmem [shape: f32[1,32,32], index: 0, kind: input, shape index: {}]
  %s1 = inlined_call_operand.vmem [shape: f32[1,4,32,32], index: 1, kind: input, shape index: {}]
  %s2 = inlined_call_operand.vmem [shape: f32[1,32,4], index: 2, kind: input, shape index: {}]
  %s3 = inlined_call_operand.vmem [shape: f32[1,32,32], index: 3, kind: input, shape index: {}]
  %s4 = inlined_call_operand.vmem [shape: f32[32,32], index: 4, kind: input, shape index: {}]
  %s5 = inlined_call_operand.vmem [shape: f32[32,32], index: 5, kind: input, shape index: {}]
  %s6 = inlined_call_operand.vmem [shape: f32[2,32], index: 6, kind: input, shape index: {}]
  %s7 = inlined_call_operand.vmem [shape: f32[32,2], index: 7, kind: input, shape index: {}]
  %s8 = inlined_call_operand.vmem [shape: f32[32,8], index: 8, kind: input, shape index: {}]
  %s9 = inlined_call_operand.vmem [shape: f32[1,8], index: 9, kind: input, shape index: {}]
  %s10 = inlined_call_operand.vmem [shape: f32[8,8], index: 10, kind: input, shape index: {}]
  %s11 = inlined_call_operand.vmem [shape: f32[1,8], index: 11, kind: input, shape index: {}]
  %s12 = inlined_call_operand.vmem [shape: f32[8,4], index: 12, kind: input, shape index: {}]
  %s13 = inlined_call_operand.vmem [shape: f32[3,32,64], index: 13, kind: input, shape index: {}]
  %s14 = inlined_call_operand.vmem [shape: f32[1,64], index: 14, kind: input, shape index: {}]
  %s15 = inlined_call_operand.vmem [shape: f32[64,96], index: 15, kind: input, shape index: {}]
  %s16 = inlined_call_operand.vmem [shape: f32[32,96], index: 16, kind: input, shape index: {}]
  %s17 = inlined_call_operand.vmem [shape: f32[1,64], index: 17, kind: input, shape index: {}]
  %s18 = inlined_call_operand.vmem [shape: f32[1,32], index: 18, kind: input, shape index: {}]
  %s19 = inlined_call_operand.vmem [shape: f32[1,32], index: 19, kind: input, shape index: {}]
  %s20 = inlined_call_operand.vmem [shape: f32[32,8], index: 20, kind: input, shape index: {}]
  %s21 = inlined_call_operand.vmem [shape: f32[1,8], index: 21, kind: input, shape index: {}]
  %s22 = inlined_call_operand.vmem [shape: f32[1,32,40], index: 22, kind: output, shape index: {}]
  %s23 = sld [smem:[#allocation0]]
  $region98: #{phycell_forward.1} parent=0
    _
  %s25 = ssub.s32 1, %s23
  %s26 = scalar_select 0, %s25, %s23
  // Predicated region
  $region2: #{phycell_forward.1} parent=0 // pred_check
    _
  $region3: #{phycell_forward.1} parent=0 // pred_check_branch
    %28 = sbr.rel (0) target = $region5
  $region4: #{phycell_forward.1} parent=0 // pred_region
    _
  $region5: #{phycell_forward.1} parent=0 // pred_fallthru
    _
  // Predicated region
  $region6: #{phycell_forward.1} parent=0 // pred_check
    _
  $region7: #{phycell_forward.1} parent=0 // pred_check_branch
    %30 = sbr.rel (0) target = $region9
  $region8: #{phycell_forward.1} parent=0 // pred_region
    _
  $region9: #{phycell_forward.1} parent=0 // pred_fallthru
    _
  // Predicated region
  $region10: #{phycell_forward.1} parent=0 // pred_check
    _
  $region11: #{phycell_forward.1} parent=0 // pred_check_branch
    %32 = sbr.rel (0) target = $region13
  $region12: #{phycell_forward.1} parent=0 // pred_region
    _
  $region13: #{phycell_forward.1} parent=0 // pred_fallthru
    _
  // Predicated region
  $region14: #{phycell_forward.1} parent=0 // pred_check
    _
  $region15: #{phycell_forward.1} parent=0 // pred_check_branch
    %34 = sbr.rel (0) target = $region17
  $region16: #{phycell_forward.1} parent=0 // pred_region
    _
  $region17: #{phycell_forward.1} parent=0 // pred_fallthru
    _
  // Predicated region
  $region18: #{phycell_forward.1} parent=0 // pred_check
    _
  $region19: #{phycell_forward.1} parent=0 // pred_check_branch
    %36 = sbr.rel (0) target = $region21
  $region20: #{phycell_forward.1} parent=0 // pred_region
    _
  $region21: #{phycell_forward.1} parent=0 // pred_fallthru
    _
  // Predicated region
  $region22: #{phycell_forward.1} parent=0 // pred_check
    _
  $region23: #{phycell_forward.1} parent=0 // pred_check_branch
    %38 = sbr.rel (0) target = $region25
  $region24: #{phycell_forward.1} parent=0 // pred_region
    _
  $region25: #{phycell_forward.1} parent=0 // pred_fallthru
    _
  // Predicated region
  $region26: #{phycell_forward.1} parent=0 // pred_check
    _
  $region27: #{phycell_forward.1} parent=0 // pred_check_branch
    %40 = sbr.rel (0) target = $region29
  $region28: #{phycell_forward.1} parent=0 // pred_region
    _
  $region29: #{phycell_forward.1} parent=0 // pred_fallthru
    _
  // Predicated region
  $region30: #{phycell_forward.1} parent=0 // pred_check
    _
  $region31: #{phycell_forward.1} parent=0 // pred_check_branch
    %42 = sbr.rel (0) target = $region33
  $region32: #{phycell_forward.1} parent=0 // pred_region
    _
  $region33: #{phycell_forward.1} parent=0 // pred_fallthru
    _
  // Predicated region
  $region34: #{phycell_forward.1} parent=0 // pred_check
    _
  $region35: #{phycell_forward.1} parent=0 // pred_check_branch
    %44 = sbr.rel (0) target = $region37
  $region36: #{phycell_forward.1} parent=0 // pred_region
    _
  $region37: #{phycell_forward.1} parent=0 // pred_fallthru
    _
  // Predicated region
  $region38: #{phycell_forward.1} parent=0 // pred_check
    _
  $region39: #{phycell_forward.1} parent=0 // pred_check_branch
    %46 = sbr.rel (0) target = $region41
  $region40: #{phycell_forward.1} parent=0 // pred_region
    _
  $region41: #{phycell_forward.1} parent=0 // pred_fallthru
    _
  // Predicated region
  $region42: #{phycell_forward.1} parent=0 // pred_check
    _
  $region43: #{phycell_forward.1} parent=0 // pred_check_branch
    %48 = sbr.rel (0) target = $region45
  $region44: #{phycell_forward.1} parent=0 // pred_region
    _
  $region45: #{phycell_forward.1} parent=0 // pred_fallthru
    _
  // Predicated region
  $region46: #{phycell_forward.1} parent=0 // pred_check
    _
  $region47: #{phycell_forward.1} parent=0 // pred_check_branch
    %50 = sbr.rel (0) target = $region49
  $region48: #{phycell_forward.1} parent=0 // pred_region
    _
  $region49: #{phycell_forward.1} parent=0 // pred_fallthru
    _
  // Predicated region
  $region50: #{phycell_forward.1} parent=0 // pred_check
    _
  $region51: #{phycell_forward.1} parent=0 // pred_check_branch
    %52 = sbr.rel (0) target = $region53
  $region52: #{phycell_forward.1} parent=0 // pred_region
    _
  $region53: #{phycell_forward.1} parent=0 // pred_fallthru
    _
  // Predicated region
  $region54: #{phycell_forward.1} parent=0 // pred_check
    _
  $region55: #{phycell_forward.1} parent=0 // pred_check_branch
    %54 = sbr.rel (0) target = $region57
  $region56: #{phycell_forward.1} parent=0 // pred_region
    _
  $region57: #{phycell_forward.1} parent=0 // pred_fallthru
    _
  // Predicated region
  $region58: #{phycell_forward.1} parent=0 // pred_check
    _
  $region59: #{phycell_forward.1} parent=0 // pred_check_branch
    %56 = sbr.rel (0) target = $region61
  $region60: #{phycell_forward.1} parent=0 // pred_region
    _
  $region61: #{phycell_forward.1} parent=0 // pred_fallthru
    _
  // Predicated region
  $region62: #{phycell_forward.1} parent=0 // pred_check
    _
  $region63: #{phycell_forward.1} parent=0 // pred_check_branch
    %58 = sbr.rel (0) target = $region65
  $region64: #{phycell_forward.1} parent=0 // pred_region
    _
  $region65: #{phycell_forward.1} parent=0 // pred_fallthru
    _
  // Predicated region
  $region66: #{phycell_forward.1} parent=0 // pred_check
    _
  $region67: #{phycell_forward.1} parent=0 // pred_check_branch
    %60 = sbr.rel (0) target = $region69
  $region68: #{phycell_forward.1} parent=0 // pred_region
    _
  $region69: #{phycell_forward.1} parent=0 // pred_fallthru
    _
  // Predicated region
  $region70: #{phycell_forward.1} parent=0 // pred_check
    _
  $region71: #{phycell_forward.1} parent=0 // pred_check_branch
    %62 = sbr.rel (0) target = $region73
  $region72: #{phycell_forward.1} parent=0 // pred_region
    _
  $region73: #{phycell_forward.1} parent=0 // pred_fallthru
    _
  // Predicated region
  $region74: #{phycell_forward.1} parent=0 // pred_check
    _
  $region75: #{phycell_forward.1} parent=0 // pred_check_branch
    %64 = sbr.rel (0) target = $region77
  $region76: #{phycell_forward.1} parent=0 // pred_region
    _
  $region77: #{phycell_forward.1} parent=0 // pred_fallthru
    _
  // Predicated region
  $region78: #{phycell_forward.1} parent=0 // pred_check
    _
  $region79: #{phycell_forward.1} parent=0 // pred_check_branch
    %66 = sbr.rel (0) target = $region81
  $region80: #{phycell_forward.1} parent=0 // pred_region
    _
  $region81: #{phycell_forward.1} parent=0 // pred_fallthru
    _
  // Predicated region
  $region82: #{phycell_forward.1} parent=0 // pred_check
    _
  $region83: #{phycell_forward.1} parent=0 // pred_check_branch
    %68 = sbr.rel (0) target = $region85
  $region84: #{phycell_forward.1} parent=0 // pred_region
    _
  $region85: #{phycell_forward.1} parent=0 // pred_fallthru
    _
  // Predicated region
  $region86: #{phycell_forward.1} parent=0 // pred_check
    _
  $region87: #{phycell_forward.1} parent=0 // pred_check_branch
    %70 = sbr.rel (0) target = $region89
  $region88: #{phycell_forward.1} parent=0 // pred_region
    _
  $region89: #{phycell_forward.1} parent=0 // pred_fallthru
    _
  %v71 = vld [vmem:[%s0] sm:$0xff]
  %v72 = vld [vmem:[%s0 + $0x8] sm:$0xff]
  %v73 = vld [vmem:[%s0 + $0x10] sm:$0xff]
  %v74 = vld [vmem:[%s0 + $0x18] sm:$0xff]
  %v75 = vld [vmem:[%s3] sm:$0xff]
  %v76 = vld [vmem:[%s3 + $0x8] sm:$0xff]
  %v77 = vld [vmem:[%s3 + $0x10] sm:$0xff]
  %v78 = vld [vmem:[%s3 + $0x18] sm:$0xff]
  %v79 = vld [vmem:[%s5] sm:$0xff]
  %v80 = vld [vmem:[%s5 + $0x8] sm:$0xff]
  %v81 = vld [vmem:[%s5 + $0x10] sm:$0xff]
  %v82 = vld [vmem:[%s5 + $0x18] sm:$0xff]
  %v83 = vld [vmem:[%s6] sm:$0x3]
  %v84 = vld [vmem:[%s7] sm:$0xff]
  %v85 = vld [vmem:[%s7 + $0x8] sm:$0xff]
  %v86 = vld [vmem:[%s7 + $0x10] sm:$0xff]
  %v87 = vld [vmem:[%s7 + $0x18] sm:$0xff]
  %v88 = vld [vmem:[%s8] sm:$0xff]
  %v89 = vld [vmem:[%s8 + $0x8] sm:$0xff]
  %v90 = vld [vmem:[%s8 + $0x10] sm:$0xff]
  %v91 = vld [vmem:[%s8 + $0x18] sm:$0xff]
  %v92 = vld [vmem:[%s9] sm:$0x1]
  %v94 = vperm.slane %v92, 0
  %vm96 = vcmask 261120
  %v98 = vsel %vm96, %v71, 0
  %v101 = vsel %vm96, %v72, 0
  %v104 = vsel %vm96, %v73, 0
  %v107 = vsel %vm96, %v74, 0
  %109 = vmatpush.msra.mxu0 0.0
  %110 = vmatpush.msra.mxu0 0.0
  %111 = vmatpush.msra.mxu0 0.0
  %112 = vmatpush.msra.mxu0 0.0
  %113 = vmatpush.msra.mxu0 0.0
  %114 = vmatpush.msra.mxu0 0.0
  %115 = vmatpush.msra.mxu0 0.0
  %116 = vmatpush.msra.mxu0 0.0
  %117 = vmatpush.msra.mxu0 0.0
  %118 = vmatpush.msra.mxu0 0.0
  %119 = vmatpush.msra.mxu0 0.0
  %120 = vmatpush.msra.mxu0 0.0
  %121 = vmatpush.msra.mxu0 %v91
  %122 = vmatpush.msra.mxu0 %v90
  %123 = vmatpush.msra.mxu0 %v89
  %124 = vmatpush.msra.mxu0 %v88
  %125 = vmatmul.f32.gmra.mxu0 %v98
  %v126 = vpop.f32.mrf.mxu0
  %v127 = vadd.f32 %v94, %v126
  %128 = vmatmul.f32.gmra.mxu0 %v101
  %v129 = vpop.f32.mrf.mxu0
  %v130 = vadd.f32 %v94, %v129
  %131 = vmatmul.f32.gmra.mxu0 %v104
  %v132 = vpop.f32.mrf.mxu0
  %v133 = vadd.f32 %v94, %v132
  %134 = vmatmul.f32.gmra.mxu0 %v107
  %v135 = vpop.f32.mrf.mxu0
  %v136 = vadd.f32 %v94, %v135
  %137 = vdwg.mxu0
  %v138 = vmax.f32 %v127, 0.0
  %v139 = vmax.f32 %v130, 0.0
  %v140 = vmax.f32 %v133, 0.0
  %v141 = vmax.f32 %v136, 0.0
  %v142 = vld [vmem:[%s10] sm:$0xff]
  %v143 = vld [vmem:[%s11] sm:$0x1]
  %v145 = vperm.slane %v143, 0
  %vm147 = vcmask 64512
  %v149 = vsel %vm147, %v138, 0
  %v152 = vsel %vm147, %v139, 0
  %v155 = vsel %vm147, %v140, 0
  %v158 = vsel %vm147, %v141, 0
  %160 = vmatpush.msra.mxu0 0.0
  %161 = vmatpush.msra.mxu0 0.0
  %162 = vmatpush.msra.mxu0 0.0
  %163 = vmatpush.msra.mxu0 0.0
  %164 = vmatpush.msra.mxu0 0.0
  %165 = vmatpush.msra.mxu0 0.0
  %166 = vmatpush.msra.mxu0 0.0
  %167 = vmatpush.msra.mxu0 0.0
  %168 = vmatpush.msra.mxu0 0.0
  %169 = vmatpush.msra.mxu0 0.0
  %170 = vmatpush.msra.mxu0 0.0
  %171 = vmatpush.msra.mxu0 0.0
  %172 = vmatpush.msra.mxu0 0.0
  %173 = vmatpush.msra.mxu0 0.0
  %174 = vmatpush.msra.mxu0 0.0
  %175 = vmatpush.msra.mxu0 %v142
  %176 = vmatmul.f32.gmra.mxu0 %v149
  %v177 = vpop.f32.mrf.mxu0
  %v178 = vadd.f32 %v145, %v177
  %179 = vmatmul.f32.gmra.mxu0 %v152
  %v180 = vpop.f32.mrf.mxu0
  %v181 = vadd.f32 %v145, %v180
  %182 = vmatmul.f32.gmra.mxu0 %v155
  %v183 = vpop.f32.mrf.mxu0
  %v184 = vadd.f32 %v145, %v183
  %185 = vmatmul.f32.gmra.mxu0 %v158
  %v186 = vpop.f32.mrf.mxu0
  %v187 = vadd.f32 %v145, %v186
  %188 = vdwg.mxu0
  %v189 = vsel %vm147, %v178, -inf
  %190 = vmax.xlane.f32.xlu0 %v189
  %v191 = vpop.xlane.xlu0 %190
  %v192 = vsel %vm147, %v181, -inf
  %193 = vmax.xlane.f32.xlu0 %v192
  %v194 = vpop.xlane.xlu0 %193
  %v195 = vsel %vm147, %v184, -inf
  %196 = vmax.xlane.f32.xlu0 %v195
  %v197 = vpop.xlane.xlu0 %196
  %v198 = vsel %vm147, %v187, -inf
  %199 = vmax.xlane.f32.xlu0 %v198
  %v200 = vpop.xlane.xlu0 %199
  %v201 = vsub.f32 %v178, %v191
  %v202 = vsub.f32 %v181, %v194
  %v203 = vsub.f32 %v184, %v197
  %v204 = vsub.f32 %v187, %v200
  %v205 = vmul.f32 %v201, 1.442695
  %v206 = vpow.pop %v205
  %v207 = vmul.f32 %v202, 1.442695
  %v208 = vpow.pop %v207
  %v209 = vmul.f32 %v203, 1.442695
  %v210 = vpow.pop %v209
  %v211 = vmul.f32 %v204, 1.442695
  %v212 = vpow.pop %v211
  %v213 = vsel %vm147, %v206, 0.0
  %214 = vadd.xlane.f32.xlu0 %v213
  %v215 = vpop.xlane.xlu0 %214
  %v216 = vsel %vm147, %v208, 0.0
  %217 = vadd.xlane.f32.xlu0 %v216
  %v218 = vpop.xlane.xlu0 %217
  %v219 = vsel %vm147, %v210, 0.0
  %220 = vadd.xlane.f32.xlu0 %v219
  %v221 = vpop.xlane.xlu0 %220
  %v222 = vsel %vm147, %v212, 0.0
  %223 = vadd.xlane.f32.xlu0 %v222
  %v224 = vpop.xlane.xlu0 %223
  %v225 = vrcp.pop %v215
  %v226 = vrcp.pop %v218
  %v227 = vrcp.pop %v221
  %v228 = vrcp.pop %v224
  %v229 = vmul.f32 %v206, %v225
  %v230 = vmul.f32 %v208, %v226
  %v231 = vmul.f32 %v210, %v227
  %v232 = vmul.f32 %v212, %v228
  %v233 = vld [vmem:[%s12] sm:$0xff]
  %v235 = vsel %vm147, %v229, 0
  %v238 = vsel %vm147, %v230, 0
  %v241 = vsel %vm147, %v231, 0
  %v244 = vsel %vm147, %v232, 0
  %246 = vmatpush.msra.mxu0 0.0
  %247 = vmatpush.msra.mxu0 0.0
  %248 = vmatpush.msra.mxu0 0.0
  %249 = vmatpush.msra.mxu0 0.0
  %250 = vmatpush.msra.mxu0 0.0
  %251 = vmatpush.msra.mxu0 0.0
  %252 = vmatpush.msra.mxu0 0.0
  %253 = vmatpush.msra.mxu0 0.0
  %254 = vmatpush.msra.mxu0 0.0
  %255 = vmatpush.msra.mxu0 0.0
  %256 = vmatpush.msra.mxu0 0.0
  %257 = vmatpush.msra.mxu0 0.0
  %258 = vmatpush.msra.mxu0 0.0
  %259 = vmatpush.msra.mxu0 0.0
  %260 = vmatpush.msra.mxu0 0.0
  %261 = vmatpush.msra.mxu0 %v233
  %262 = vmatmul.f32.gmra.mxu0 %v235
  %v263 = vpop.f32.mrf.mxu0
  %v264 = vadd.f32 0.0, %v263
  %265 = vmatmul.f32.gmra.mxu0 %v238
  %v266 = vpop.f32.mrf.mxu0
  %v267 = vadd.f32 0.0, %v266
  %268 = vmatmul.f32.gmra.mxu0 %v241
  %v269 = vpop.f32.mrf.mxu0
  %v270 = vadd.f32 0.0, %v269
  %271 = vmatmul.f32.gmra.mxu0 %v244
  %v272 = vpop.f32.mrf.mxu0
  %v273 = vadd.f32 0.0, %v272
  %274 = vdwg.mxu0
  %v275 = vld [vmem:[%s1] sm:$0xff]
  %v276 = vld [vmem:[%s1 + $0x8] sm:$0xff]
  %v277 = vld [vmem:[%s1 + $0x10] sm:$0xff]
  %v278 = vld [vmem:[%s1 + $0x18] sm:$0xff]
  %280 = vset.pattern.permute.xlu0 0
  %281 = vperm.xlu0 %280, %v264
  %v282 = vpop.permute.xlu0 %281
  %285 = vset.pattern.permute.xlu0 0
  %286 = vperm.xlu0 %285, %v267
  %v287 = vpop.permute.xlu0 %286
  %290 = vset.pattern.permute.xlu0 0
  %291 = vperm.xlu0 %290, %v270
  %v292 = vpop.permute.xlu0 %291
  %295 = vset.pattern.permute.xlu0 0
  %296 = vperm.xlu0 %295, %v273
  %v297 = vpop.permute.xlu0 %296
  %v299 = vmul.f32 %v282, %v275
  %v300 = vmul.f32 %v287, %v276
  %v301 = vmul.f32 %v292, %v277
  %v302 = vmul.f32 %v297, %v278
  %s303 = scalar_lea.vmem %s1, 32
  %v304 = vld [vmem:[%s303] sm:$0xff]
  %v305 = vld [vmem:[%s303 + $0x8] sm:$0xff]
  %v306 = vld [vmem:[%s303 + $0x10] sm:$0xff]
  %v307 = vld [vmem:[%s303 + $0x18] sm:$0xff]
  %308 = vset.pattern.permute.xlu0 1
  %309 = vperm.xlu0 %308, %v264
  %v310 = vpop.permute.xlu0 %309
  %312 = vset.pattern.permute.xlu0 1
  %313 = vperm.xlu0 %312, %v267
  %v314 = vpop.permute.xlu0 %313
  %316 = vset.pattern.permute.xlu0 1
  %317 = vperm.xlu0 %316, %v270
  %v318 = vpop.permute.xlu0 %317
  %320 = vset.pattern.permute.xlu0 1
  %321 = vperm.xlu0 %320, %v273
  %v322 = vpop.permute.xlu0 %321
  %v324 = vmul.f32 %v310, %v304
  %v325 = vmul.f32 %v314, %v305
  %v326 = vmul.f32 %v318, %v306
  %v327 = vmul.f32 %v322, %v307
  %v328 = vadd.f32 %v299, %v324
  %v329 = vadd.f32 %v300, %v325
  %v330 = vadd.f32 %v301, %v326
  %v331 = vadd.f32 %v302, %v327
  %s332 = scalar_lea.vmem %s1, 64
  %v333 = vld [vmem:[%s332] sm:$0xff]
  %v334 = vld [vmem:[%s332 + $0x8] sm:$0xff]
  %v335 = vld [vmem:[%s332 + $0x10] sm:$0xff]
  %v336 = vld [vmem:[%s332 + $0x18] sm:$0xff]
  %337 = vset.pattern.permute.xlu0 2
  %338 = vperm.xlu0 %337, %v264
  %v339 = vpop.permute.xlu0 %338
  %341 = vset.pattern.permute.xlu0 2
  %342 = vperm.xlu0 %341, %v267
  %v343 = vpop.permute.xlu0 %342
  %345 = vset.pattern.permute.xlu0 2
  %346 = vperm.xlu0 %345, %v270
  %v347 = vpop.permute.xlu0 %346
  %349 = vset.pattern.permute.xlu0 2
  %350 = vperm.xlu0 %349, %v273
  %v351 = vpop.permute.xlu0 %350
  %v353 = vmul.f32 %v339, %v333
  %v354 = vmul.f32 %v343, %v334
  %v355 = vmul.f32 %v347, %v335
  %v356 = vmul.f32 %v351, %v336
  %v357 = vadd.f32 %v328, %v353
  %v358 = vadd.f32 %v329, %v354
  %v359 = vadd.f32 %v330, %v355
  %v360 = vadd.f32 %v331, %v356
  %s361 = scalar_lea.vmem %s1, 96
  %v362 = vld [vmem:[%s361] sm:$0xff]
  %v363 = vld [vmem:[%s361 + $0x8] sm:$0xff]
  %v364 = vld [vmem:[%s361 + $0x10] sm:$0xff]
  %v365 = vld [vmem:[%s361 + $0x18] sm:$0xff]
  %366 = vset.pattern.permute.xlu0 3
  %367 = vperm.xlu0 %366, %v264
  %v368 = vpop.permute.xlu0 %367
  %370 = vset.pattern.permute.xlu0 3
  %371 = vperm.xlu0 %370, %v267
  %v372 = vpop.permute.xlu0 %371
  %374 = vset.pattern.permute.xlu0 3
  %375 = vperm.xlu0 %374, %v270
  %v376 = vpop.permute.xlu0 %375
  %378 = vset.pattern.permute.xlu0 3
  %379 = vperm.xlu0 %378, %v273
  %v380 = vpop.permute.xlu0 %379
  %v382 = vmul.f32 %v368, %v362
  %v383 = vmul.f32 %v372, %v363
  %v384 = vmul.f32 %v376, %v364
  %v385 = vmul.f32 %v380, %v365
  %v386 = vadd.f32 %v357, %v382
  %v387 = vadd.f32 %v358, %v383
  %v388 = vadd.f32 %v359, %v384
  %v389 = vadd.f32 %v360, %v385
  %v390 = vand.u32 2147483647, %v386
  %v391 = vand.u32 2147483647, %v387
  %v392 = vand.u32 2147483647, %v388
  %v393 = vand.u32 2147483647, %v389
  %v394 = vsel %vm96, %v390, 0.0
  %v395 = vsel %vm96, %v391, 0.0
  %v396 = vadd.f32 %v394, %v395
  %v397 = vsel %vm96, %v392, 0.0
  %v398 = vadd.f32 %v396, %v397
  %v399 = vsel %vm96, %v393, 0.0
  %v400 = vadd.f32 %v398, %v399
  %v401 = vrot.slane %v400, 4
  %v402 = vadd.f32 %v400, %v401
  %v403 = vrot.slane %v402, 2
  %v404 = vadd.f32 %v402, %v403
  %v405 = vrot.slane %v404, 1
  %v406 = vadd.f32 %v404, %v405
  %v407 = vmax.f32 %v406, 1e-12
  %v408 = vrcp.pop %v407
  %v409 = vmul.f32 %v386, %v408
  %v410 = vmul.f32 %v387, %v408
  %v411 = vmul.f32 %v388, %v408
  %v412 = vmul.f32 %v389, %v408
  %v413 = vadd.f32 %v409, %v79
  %v414 = vadd.f32 %v410, %v80
  %v415 = vadd.f32 %v411, %v81
  %v416 = vadd.f32 %v412, %v82
  %v417 = vld [vmem:[%s4] sm:$0xff]
  %v418 = vld [vmem:[%s4 + $0x8] sm:$0xff]
  %v419 = vld [vmem:[%s4 + $0x10] sm:$0xff]
  %v420 = vld [vmem:[%s4 + $0x18] sm:$0xff]
  %v421 = vadd.f32 %v413, %v417
  %v422 = vadd.f32 %v414, %v418
  %v423 = vadd.f32 %v415, %v419
  %v424 = vadd.f32 %v416, %v420
  %v425 = vsel %vm96, %v421, 0.0
  %426 = vadd.xlane.f32.xlu0 %v425
  %v427 = vpop.xlane.xlu0 %426
  %v428 = vsel %vm96, %v422, 0.0
  %429 = vadd.xlane.f32.xlu0 %v428
  %v430 = vpop.xlane.xlu0 %429
  %v431 = vsel %vm96, %v423, 0.0
  %432 = vadd.xlane.f32.xlu0 %v431
  %v433 = vpop.xlane.xlu0 %432
  %v434 = vsel %vm96, %v424, 0.0
  %435 = vadd.xlane.f32.xlu0 %v434
  %v436 = vpop.xlane.xlu0 %435
  %v437 = vsub.f32 0.0, %v421
  %v438 = vsub.f32 0.0, %v422
  %v439 = vsub.f32 0.0, %v423
  %v440 = vsub.f32 0.0, %v424
  %v441 = vsub.f32 1.0, %v79
  %v442 = vsub.f32 1.0, %v80
  %v443 = vsub.f32 1.0, %v81
  %v444 = vsub.f32 1.0, %v82
  %v445 = vmul.f32 %v437, %v441
  %v446 = vmul.f32 %v438, %v442
  %v447 = vmul.f32 %v439, %v443
  %v448 = vmul.f32 %v440, %v444
  %v449 = vmul.f32 %v79, %v427
  %v450 = vmul.f32 %v80, %v430
  %v451 = vmul.f32 %v81, %v433
  %v452 = vmul.f32 %v82, %v436
  %v453 = vadd.f32 %v445, %v449
  %v454 = vadd.f32 %v446, %v450
  %v455 = vadd.f32 %v447, %v451
  %v456 = vadd.f32 %v448, %v452
  %v457 = vrsqrt.pop %v427
  %v458 = vmul.f32 %v457, %v427
  %v459 = vmul.f32 %v458, %v457
  %v460 = vmul.f32 0.5, %v459
  %v461 = vsub.f32 1.5, %v460
  %v462 = vmul.f32 %v457, %v461
  %vm463 = vweird.f32 %v427
  %vm464 = vweird.f32 %v457
  %vm465 = vmor %vm463, %vm464
  %v466 = vsel %vm465, %v457, %v462
  %v467 = vrsqrt.pop %v430
  %v468 = vmul.f32 %v467, %v430
  %v469 = vmul.f32 %v468, %v467
  %v470 = vmul.f32 0.5, %v469
  %v471 = vsub.f32 1.5, %v470
  %v472 = vmul.f32 %v467, %v471
  %vm473 = vweird.f32 %v430
  %vm474 = vweird.f32 %v467
  %vm475 = vmor %vm473, %vm474
  %v476 = vsel %vm475, %v467, %v472
  %v477 = vrsqrt.pop %v433
  %v478 = vmul.f32 %v477, %v433
  %v479 = vmul.f32 %v478, %v477
  %v480 = vmul.f32 0.5, %v479
  %v481 = vsub.f32 1.5, %v480
  %v482 = vmul.f32 %v477, %v481
  %vm483 = vweird.f32 %v433
  %vm484 = vweird.f32 %v477
  %vm485 = vmor %vm483, %vm484
  %v486 = vsel %vm485, %v477, %v482
  %v487 = vrsqrt.pop %v436
  %v488 = vmul.f32 %v487, %v436
  %v489 = vmul.f32 %v488, %v487
  %v490 = vmul.f32 0.5, %v489
  %v491 = vsub.f32 1.5, %v490
  %v492 = vmul.f32 %v487, %v491
  %vm493 = vweird.f32 %v436
  %vm494 = vweird.f32 %v487
  %vm495 = vmor %vm493, %vm494
  %v496 = vsel %vm495, %v487, %v492
  %v497 = vmul.f32 %v466, %v453
  %v498 = vmul.f32 %v476, %v454
  %v499 = vmul.f32 %v486, %v455
  %v500 = vmul.f32 %v496, %v456
  %v501 = vmul.f32 %v79, %v466
  %v502 = vmul.f32 %v80, %v476
  %v503 = vmul.f32 %v81, %v486
  %v504 = vmul.f32 %v82, %v496
  %v506 = vsel %vm96, %v497, 0
  %v509 = vsel %vm96, %v498, 0
  %v512 = vsel %vm96, %v499, 0
  %v515 = vsel %vm96, %v500, 0
  %517 = vmatpush.msra.mxu0 0.0
  %518 = vmatpush.msra.mxu0 0.0
  %519 = vmatpush.msra.mxu0 0.0
  %520 = vmatpush.msra.mxu0 0.0
  %521 = vmatpush.msra.mxu0 0.0
  %522 = vmatpush.msra.mxu0 0.0
  %523 = vmatpush.msra.mxu0 0.0
  %524 = vmatpush.msra.mxu0 0.0
  %525 = vmatpush.msra.mxu0 0.0
  %526 = vmatpush.msra.mxu0 0.0
  %527 = vmatpush.msra.mxu0 0.0
  %528 = vmatpush.msra.mxu0 0.0
  %529 = vmatpush.msra.mxu0 %v504
  %530 = vmatpush.msra.mxu0 %v503
  %531 = vmatpush.msra.mxu0 %v502
  %532 = vmatpush.msra.mxu0 %v501
  %533 = vmatmul.f32.gmra.mxu0 %v506
  %v534 = vpop.f32.mrf.mxu0
  %v535 = vadd.f32 0.0, %v534
  %536 = vmatmul.f32.gmra.mxu0 %v509
  %v537 = vpop.f32.mrf.mxu0
  %v538 = vadd.f32 0.0, %v537
  %539 = vmatmul.f32.gmra.mxu0 %v512
  %v540 = vpop.f32.mrf.mxu0
  %v541 = vadd.f32 0.0, %v540
  %542 = vmatmul.f32.gmra.mxu0 %v515
  %v543 = vpop.f32.mrf.mxu0
  %v544 = vadd.f32 0.0, %v543
  %545 = vdwg.mxu0
  %v547 = vsel %vm96, %v535, 0
  %v550 = vsel %vm96, %v538, 0
  %v553 = vsel %vm96, %v541, 0
  %v556 = vsel %vm96, %v544, 0
  %558 = vmatpush.msra.mxu0 0.0
  %559 = vmatpush.msra.mxu0 0.0
  %560 = vmatpush.msra.mxu0 0.0
  %561 = vmatpush.msra.mxu0 0.0
  %562 = vmatpush.msra.mxu0 0.0
  %563 = vmatpush.msra.mxu0 0.0
  %564 = vmatpush.msra.mxu0 0.0
  %565 = vmatpush.msra.mxu0 0.0
  %566 = vmatpush.msra.mxu0 0.0
  %567 = vmatpush.msra.mxu0 0.0
  %568 = vmatpush.msra.mxu0 0.0
  %569 = vmatpush.msra.mxu0 0.0
  %570 = vmatpush.msra.mxu0 %v544
  %571 = vmatpush.msra.mxu0 %v541
  %572 = vmatpush.msra.mxu0 %v538
  %573 = vmatpush.msra.mxu0 %v535
  %574 = vmatmul.f32.gmra.mxu0 %v547
  %v575 = vpop.f32.mrf.mxu0
  %v576 = vadd.f32 0.0, %v575
  %577 = vmatmul.f32.gmra.mxu0 %v550
  %v578 = vpop.f32.mrf.mxu0
  %v579 = vadd.f32 0.0, %v578
  %580 = vmatmul.f32.gmra.mxu0 %v553
  %v581 = vpop.f32.mrf.mxu0
  %v582 = vadd.f32 0.0, %v581
  %583 = vmatmul.f32.gmra.mxu0 %v556
  %v584 = vpop.f32.mrf.mxu0
  %v585 = vadd.f32 0.0, %v584
  %586 = vdwg.mxu0
  %v588 = vsel %vm96, %v576, 0
  %v591 = vsel %vm96, %v579, 0
  %v594 = vsel %vm96, %v582, 0
  %v597 = vsel %vm96, %v585, 0
  %599 = vmatpush.msra.mxu0 0.0
  %600 = vmatpush.msra.mxu0 0.0
  %601 = vmatpush.msra.mxu0 0.0
  %602 = vmatpush.msra.mxu0 0.0
  %603 = vmatpush.msra.mxu0 0.0
  %604 = vmatpush.msra.mxu0 0.0
  %605 = vmatpush.msra.mxu0 0.0
  %606 = vmatpush.msra.mxu0 0.0
  %607 = vmatpush.msra.mxu0 0.0
  %608 = vmatpush.msra.mxu0 0.0
  %609 = vmatpush.msra.mxu0 0.0
  %610 = vmatpush.msra.mxu0 0.0
  %611 = vmatpush.msra.mxu0 %v585
  %612 = vmatpush.msra.mxu0 %v582
  %613 = vmatpush.msra.mxu0 %v579
  %614 = vmatpush.msra.mxu0 %v576
  %615 = vmatmul.f32.gmra.mxu0 %v588
  %v616 = vpop.f32.mrf.mxu0
  %v617 = vadd.f32 0.0, %v616
  %618 = vmatmul.f32.gmra.mxu0 %v591
  %v619 = vpop.f32.mrf.mxu0
  %v620 = vadd.f32 0.0, %v619
  %621 = vmatmul.f32.gmra.mxu0 %v594
  %v622 = vpop.f32.mrf.mxu0
  %v623 = vadd.f32 0.0, %v622
  %624 = vmatmul.f32.gmra.mxu0 %v597
  %v625 = vpop.f32.mrf.mxu0
  %v626 = vadd.f32 0.0, %v625
  %627 = vdwg.mxu0
  %v629 = vsel %vm96, %v617, 0
  %v632 = vsel %vm96, %v620, 0
  %v635 = vsel %vm96, %v623, 0
  %v638 = vsel %vm96, %v626, 0
  %640 = vmatpush.msra.mxu0 0.0
  %641 = vmatpush.msra.mxu0 0.0
  %642 = vmatpush.msra.mxu0 0.0
  %643 = vmatpush.msra.mxu0 0.0
  %644 = vmatpush.msra.mxu0 0.0
  %645 = vmatpush.msra.mxu0 0.0
  %646 = vmatpush.msra.mxu0 0.0
  %647 = vmatpush.msra.mxu0 0.0
  %648 = vmatpush.msra.mxu0 0.0
  %649 = vmatpush.msra.mxu0 0.0
  %650 = vmatpush.msra.mxu0 0.0
  %651 = vmatpush.msra.mxu0 0.0
  %652 = vmatpush.msra.mxu0 %v626
  %653 = vmatpush.msra.mxu0 %v623
  %654 = vmatpush.msra.mxu0 %v620
  %655 = vmatpush.msra.mxu0 %v617
  %656 = vmatmul.f32.gmra.mxu0 %v629
  %v657 = vpop.f32.mrf.mxu0
  %v658 = vadd.f32 0.0, %v657
  %659 = vmatmul.f32.gmra.mxu0 %v632
  %v660 = vpop.f32.mrf.mxu0
  %v661 = vadd.f32 0.0, %v660
  %662 = vmatmul.f32.gmra.mxu0 %v635
  %v663 = vpop.f32.mrf.mxu0
  %v664 = vadd.f32 0.0, %v663
  %665 = vmatmul.f32.gmra.mxu0 %v638
  %v666 = vpop.f32.mrf.mxu0
  %v667 = vadd.f32 0.0, %v666
  %668 = vdwg.mxu0
  %v670 = vsel %vm96, %v658, 0
  %v673 = vsel %vm96, %v661, 0
  %v676 = vsel %vm96, %v664, 0
  %v679 = vsel %vm96, %v667, 0
  %681 = vmatpush.msra.mxu0 0.0
  %682 = vmatpush.msra.mxu0 0.0
  %683 = vmatpush.msra.mxu0 0.0
  %684 = vmatpush.msra.mxu0 0.0
  %685 = vmatpush.msra.mxu0 0.0
  %686 = vmatpush.msra.mxu0 0.0
  %687 = vmatpush.msra.mxu0 0.0
  %688 = vmatpush.msra.mxu0 0.0
  %689 = vmatpush.msra.mxu0 0.0
  %690 = vmatpush.msra.mxu0 0.0
  %691 = vmatpush.msra.mxu0 0.0
  %692 = vmatpush.msra.mxu0 0.0
  %693 = vmatpush.msra.mxu0 %v667
  %694 = vmatpush.msra.mxu0 %v664
  %695 = vmatpush.msra.mxu0 %v661
  %696 = vmatpush.msra.mxu0 %v658
  %697 = vmatmul.f32.gmra.mxu0 %v670
  %v698 = vpop.f32.mrf.mxu0
  %v699 = vadd.f32 0.0, %v698
  %700 = vmatmul.f32.gmra.mxu0 %v673
  %v701 = vpop.f32.mrf.mxu0
  %v702 = vadd.f32 0.0, %v701
  %703 = vmatmul.f32.gmra.mxu0 %v676
  %v704 = vpop.f32.mrf.mxu0
  %v705 = vadd.f32 0.0, %v704
  %706 = vmatmul.f32.gmra.mxu0 %v679
  %v707 = vpop.f32.mrf.mxu0
  %v708 = vadd.f32 0.0, %v707
  %709 = vdwg.mxu0
  %v711 = vsel %vm96, %v699, 0
  %v714 = vsel %vm96, %v702, 0
  %v717 = vsel %vm96, %v705, 0
  %v720 = vsel %vm96, %v708, 0
  %722 = vmatpush.msra.mxu0 0.0
  %723 = vmatpush.msra.mxu0 0.0
  %724 = vmatpush.msra.mxu0 0.0
  %725 = vmatpush.msra.mxu0 0.0
  %726 = vmatpush.msra.mxu0 0.0
  %727 = vmatpush.msra.mxu0 0.0
  %728 = vmatpush.msra.mxu0 0.0
  %729 = vmatpush.msra.mxu0 0.0
  %730 = vmatpush.msra.mxu0 0.0
  %731 = vmatpush.msra.mxu0 0.0
  %732 = vmatpush.msra.mxu0 0.0
  %733 = vmatpush.msra.mxu0 0.0
  %734 = vmatpush.msra.mxu0 %v708
  %735 = vmatpush.msra.mxu0 %v705
  %736 = vmatpush.msra.mxu0 %v702
  %737 = vmatpush.msra.mxu0 %v699
  %738 = vmatmul.f32.gmra.mxu0 %v711
  %v739 = vpop.f32.mrf.mxu0
  %v740 = vadd.f32 0.0, %v739
  %741 = vmatmul.f32.gmra.mxu0 %v714
  %v742 = vpop.f32.mrf.mxu0
  %v743 = vadd.f32 0.0, %v742
  %744 = vmatmul.f32.gmra.mxu0 %v717
  %v745 = vpop.f32.mrf.mxu0
  %v746 = vadd.f32 0.0, %v745
  %747 = vmatmul.f32.gmra.mxu0 %v720
  %v748 = vpop.f32.mrf.mxu0
  %v749 = vadd.f32 0.0, %v748
  %750 = vdwg.mxu0
  %v752 = vsel %vm96, %v83, 0
  %754 = vmatpush.msra.mxu0 0.0
  %755 = vmatpush.msra.mxu0 0.0
  %756 = vmatpush.msra.mxu0 0.0
  %757 = vmatpush.msra.mxu0 0.0
  %758 = vmatpush.msra.mxu0 0.0
  %759 = vmatpush.msra.mxu0 0.0
  %760 = vmatpush.msra.mxu0 0.0
  %761 = vmatpush.msra.mxu0 0.0
  %762 = vmatpush.msra.mxu0 0.0
  %763 = vmatpush.msra.mxu0 0.0
  %764 = vmatpush.msra.mxu0 0.0
  %765 = vmatpush.msra.mxu0 0.0
  %766 = vmatpush.msra.mxu0 %v749
  %767 = vmatpush.msra.mxu0 %v746
  %768 = vmatpush.msra.mxu0 %v743
  %769 = vmatpush.msra.mxu0 %v740
  %770 = vmatmul.f32.gmra.mxu0 %v752
  %v771 = vpop.f32.mrf.mxu0
  %v772 = vadd.f32 0.0, %v771
  %773 = vdwg.mxu0
  %v775 = vsel %vm96, %v772, 0
  %777 = vmatpush.msra.mxu0 0.0
  %778 = vmatpush.msra.mxu0 0.0
  %779 = vmatpush.msra.mxu0 0.0
  %780 = vmatpush.msra.mxu0 0.0
  %781 = vmatpush.msra.mxu0 0.0
  %782 = vmatpush.msra.mxu0 0.0
  %783 = vmatpush.msra.mxu0 0.0
  %784 = vmatpush.msra.mxu0 0.0
  %785 = vmatpush.msra.mxu0 0.0
  %786 = vmatpush.msra.mxu0 0.0
  %787 = vmatpush.msra.mxu0 0.0
  %788 = vmatpush.msra.mxu0 0.0
  %789 = vmatpush.msra.mxu0 %v544
  %790 = vmatpush.msra.mxu0 %v541
  %791 = vmatpush.msra.mxu0 %v538
  %792 = vmatpush.msra.mxu0 %v535
  %793 = vmatmul.f32.gmra.mxu0 %v775
  %v794 = vpop.f32.mrf.mxu0
  %v795 = vadd.f32 0.0, %v794
  %796 = vdwg.mxu0
  %v797 = vmul.f32 %v795, %v772
  %vm798 = vcmask 254976
  %v799 = vsel %vm798, %v797, 0.0
  %800 = vadd.xlane.f32.xlu0 %v799
  %v801 = vpop.xlane.xlu0 %800
  %v802 = vmul.f32 %v772, %v772
  %v803 = vsel %vm798, %v802, 0.0
  %804 = vadd.xlane.f32.xlu0 %v803
  %v805 = vpop.xlane.xlu0 %804
  %v806 = vadd.f32 %v805, 1e-12
  %v807 = vrcp.pop %v806
  %v808 = vmul.f32 %v801, %v807
  %v809 = vand.u32 2147483647, %v808
  %vm810 = vcmp.lt.f32.partialorder %v809, 1e-06
  %vm811 = vcmp.lt.f32.partialorder %v808, 0.0
  %v812 = vsel %vm811, -1e-06, 1e-06
  %v813 = vsel %vm810, %v812, %v808
  %v814 = vrcp.pop %v813
  %v815 = vmul.f32 %v814, 2.0
  %vm816 = vcmask 15360
  %v818 = vsel %vm816, %v84, 0
  %v821 = vsel %vm816, %v85, 0
  %v824 = vsel %vm816, %v86, 0
  %v827 = vsel %vm816, %v87, 0
  %vm829 = vcmask 1041408
  %v831 = vsel %vm829, %v815, 0
  %833 = vmatpush.msra.mxu0 0.0
  %834 = vmatpush.msra.mxu0 0.0
  %835 = vmatpush.msra.mxu0 0.0
  %836 = vmatpush.msra.mxu0 0.0
  %837 = vmatpush.msra.mxu0 0.0
  %838 = vmatpush.msra.mxu0 0.0
  %839 = vmatpush.msra.mxu0 0.0
  %840 = vmatpush.msra.mxu0 0.0
  %841 = vmatpush.msra.mxu0 0.0
  %842 = vmatpush.msra.mxu0 0.0
  %843 = vmatpush.msra.mxu0 0.0
  %844 = vmatpush.msra.mxu0 0.0
  %845 = vmatpush.msra.mxu0 0.0
  %846 = vmatpush.msra.mxu0 0.0
  %847 = vmatpush.msra.mxu0 0.0
  %848 = vmatpush.msra.mxu0 %v831
  %849 = vmatmul.f32.gmra.mxu0 %v818
  %v850 = vpop.f32.mrf.mxu0
  %v851 = vadd.f32 0.0, %v850
  %852 = vmatmul.f32.gmra.mxu0 %v821
  %v853 = vpop.f32.mrf.mxu0
  %v854 = vadd.f32 0.0, %v853
  %855 = vmatmul.f32.gmra.mxu0 %v824
  %v856 = vpop.f32.mrf.mxu0
  %v857 = vadd.f32 0.0, %v856
  %858 = vmatmul.f32.gmra.mxu0 %v827
  %v859 = vpop.f32.mrf.mxu0
  %v860 = vadd.f32 0.0, %v859
  %861 = vdwg.mxu0
  %863 = vset.pattern.permute.xlu0 0
  %864 = vperm.xlu0 %863, %v851
  %v865 = vpop.permute.xlu0 %864
  %868 = vset.pattern.permute.xlu0 0
  %869 = vperm.xlu0 %868, %v854
  %v870 = vpop.permute.xlu0 %869
  %873 = vset.pattern.permute.xlu0 0
  %874 = vperm.xlu0 %873, %v857
  %v875 = vpop.permute.xlu0 %874
  %878 = vset.pattern.permute.xlu0 0
  %879 = vperm.xlu0 %878, %v860
  %v880 = vpop.permute.xlu0 %879
  %v882 = vmul.f32 %v535, %v865
  %v883 = vmul.f32 %v538, %v870
  %v884 = vmul.f32 %v541, %v875
  %v885 = vmul.f32 %v544, %v880
  %v886 = vsub.f32 %v882, %v79
  %v887 = vsub.f32 %v883, %v80
  %v888 = vsub.f32 %v884, %v81
  %v889 = vsub.f32 %v885, %v82
  %v890 = vld [vmem:[%s13] sm:$0xff]
  %v891 = vld [vmem:[%s13 + $0x8] sm:$0xff]
  %v892 = vld [vmem:[%s13 + $0x10] sm:$0xff]
  %v893 = vld [vmem:[%s13 + $0x18] sm:$0xff]
  %v895 = vsel %vm96, %v886, 0
  %v898 = vsel %vm96, %v887, 0
  %v901 = vsel %vm96, %v888, 0
  %v904 = vsel %vm96, %v889, 0
  %906 = vmatpush.msra.mxu0 0.0
  %907 = vmatpush.msra.mxu0 0.0
  %908 = vmatpush.msra.mxu0 0.0
  %909 = vmatpush.msra.mxu0 0.0
  %910 = vmatpush.msra.mxu0 0.0
  %911 = vmatpush.msra.mxu0 0.0
  %912 = vmatpush.msra.mxu0 0.0
  %913 = vmatpush.msra.mxu0 0.0
  %914 = vmatpush.msra.mxu0 0.0
  %915 = vmatpush.msra.mxu0 0.0
  %916 = vmatpush.msra.mxu0 0.0
  %917 = vmatpush.msra.mxu0 0.0
  %918 = vmatpush.msra.mxu0 %v74
  %919 = vmatpush.msra.mxu0 %v73
  %920 = vmatpush.msra.mxu0 %v72
  %921 = vmatpush.msra.mxu0 %v71
  %922 = vmatmul.f32.gmra.mxu0 %v895
  %v923 = vpop.f32.mrf.mxu0
  %v924 = vadd.f32 0.0, %v923
  %925 = vmatmul.f32.gmra.mxu0 %v898
  %v926 = vpop.f32.mrf.mxu0
  %v927 = vadd.f32 0.0, %v926
  %928 = vmatmul.f32.gmra.mxu0 %v901
  %v929 = vpop.f32.mrf.mxu0
  %v930 = vadd.f32 0.0, %v929
  %931 = vmatmul.f32.gmra.mxu0 %v904
  %v932 = vpop.f32.mrf.mxu0
  %v933 = vadd.f32 0.0, %v932
  %934 = vdwg.mxu0
  %s935 = scalar_lea.vmem %s13, 32
  %v936 = vld [vmem:[%s935] sm:$0xff]
  %v937 = vld [vmem:[%s935 + $0x8] sm:$0xff]
  %v938 = vld [vmem:[%s935 + $0x10] sm:$0xff]
  %v939 = vld [vmem:[%s935 + $0x18] sm:$0xff]
  %v941 = vsel %vm96, %v924, 0
  %v944 = vsel %vm96, %v927, 0
  %v947 = vsel %vm96, %v930, 0
  %v950 = vsel %vm96, %v933, 0
  %952 = vmatpush.msra.mxu0 0.0
  %953 = vmatpush.msra.mxu0 0.0
  %954 = vmatpush.msra.mxu0 0.0
  %955 = vmatpush.msra.mxu0 0.0
  %956 = vmatpush.msra.mxu0 0.0
  %957 = vmatpush.msra.mxu0 0.0
  %958 = vmatpush.msra.mxu0 0.0
  %959 = vmatpush.msra.mxu0 0.0
  %960 = vmatpush.msra.mxu0 0.0
  %961 = vmatpush.msra.mxu0 0.0
  %962 = vmatpush.msra.mxu0 0.0
  %963 = vmatpush.msra.mxu0 0.0
  %964 = vmatpush.msra.mxu0 %v939
  %965 = vmatpush.msra.mxu0 %v938
  %966 = vmatpush.msra.mxu0 %v937
  %967 = vmatpush.msra.mxu0 %v936
  %968 = vmatmul.f32.gmra.mxu0 %v941
  %v969 = vpop.f32.mrf.mxu0
  %v970 = vadd.f32 0.0, %v969
  %971 = vmatmul.f32.gmra.mxu0 %v944
  %v972 = vpop.f32.mrf.mxu0
  %v973 = vadd.f32 0.0, %v972
  %974 = vmatmul.f32.gmra.mxu0 %v947
  %v975 = vpop.f32.mrf.mxu0
  %v976 = vadd.f32 0.0, %v975
  %977 = vmatmul.f32.gmra.mxu0 %v950
  %v978 = vpop.f32.mrf.mxu0
  %v979 = vadd.f32 0.0, %v978
  %980 = vdwg.mxu0
  %981 = vmatpush.msra.mxu0 0.0
  %982 = vmatpush.msra.mxu0 0.0
  %983 = vmatpush.msra.mxu0 0.0
  %984 = vmatpush.msra.mxu0 0.0
  %985 = vmatpush.msra.mxu0 0.0
  %986 = vmatpush.msra.mxu0 0.0
  %987 = vmatpush.msra.mxu0 0.0
  %988 = vmatpush.msra.mxu0 0.0
  %989 = vmatpush.msra.mxu0 0.0
  %990 = vmatpush.msra.mxu0 0.0
  %991 = vmatpush.msra.mxu0 0.0
  %992 = vmatpush.msra.mxu0 0.0
  %993 = vmatpush.msra.mxu0 %v893
  %994 = vmatpush.msra.mxu0 %v892
  %995 = vmatpush.msra.mxu0 %v891
  %996 = vmatpush.msra.mxu0 %v890
  %997 = vmatmul.f32.gmra.mxu0 %v98
  %v998 = vpop.f32.mrf.mxu0
  %v999 = vadd.f32 %v970, %v998
  %1000 = vmatmul.f32.gmra.mxu0 %v101
  %v1001 = vpop.f32.mrf.mxu0
  %v1002 = vadd.f32 %v973, %v1001
  %1003 = vmatmul.f32.gmra.mxu0 %v104
  %v1004 = vpop.f32.mrf.mxu0
  %v1005 = vadd.f32 %v976, %v1004
  %1006 = vmatmul.f32.gmra.mxu0 %v107
  %v1007 = vpop.f32.mrf.mxu0
  %v1008 = vadd.f32 %v979, %v1007
  %1009 = vdwg.mxu0
  %1010 = vmatpush.msra.mxu0 0.0
  %1011 = vmatpush.msra.mxu0 0.0
  %1012 = vmatpush.msra.mxu0 0.0
  %1013 = vmatpush.msra.mxu0 0.0
  %1014 = vmatpush.msra.mxu0 0.0
  %1015 = vmatpush.msra.mxu0 0.0
  %1016 = vmatpush.msra.mxu0 0.0
  %1017 = vmatpush.msra.mxu0 0.0
  %1018 = vmatpush.msra.mxu0 0.0
  %1019 = vmatpush.msra.mxu0 0.0
  %1020 = vmatpush.msra.mxu0 0.0
  %1021 = vmatpush.msra.mxu0 0.0
  %1022 = vmatpush.msra.mxu0 %v933
  %1023 = vmatpush.msra.mxu0 %v930
  %1024 = vmatpush.msra.mxu0 %v927
  %1025 = vmatpush.msra.mxu0 %v924
  %1026 = vmatmul.f32.gmra.mxu0 %v895
  %v1027 = vpop.f32.mrf.mxu0
  %v1028 = vadd.f32 0.0, %v1027
  %1029 = vmatmul.f32.gmra.mxu0 %v898
  %v1030 = vpop.f32.mrf.mxu0
  %v1031 = vadd.f32 0.0, %v1030
  %1032 = vmatmul.f32.gmra.mxu0 %v901
  %v1033 = vpop.f32.mrf.mxu0
  %v1034 = vadd.f32 0.0, %v1033
  %1035 = vmatmul.f32.gmra.mxu0 %v904
  %v1036 = vpop.f32.mrf.mxu0
  %v1037 = vadd.f32 0.0, %v1036
  %1038 = vdwg.mxu0
  %v1039 = vmul.f32 %v1028, 2.0
  %v1040 = vmul.f32 %v1031, 2.0
  %v1041 = vmul.f32 %v1034, 2.0
  %v1042 = vmul.f32 %v1037, 2.0
  %v1043 = vsub.f32 %v1039, %v71
  %v1044 = vsub.f32 %v1040, %v72
  %v1045 = vsub.f32 %v1041, %v73
  %v1046 = vsub.f32 %v1042, %v74
  %s1047 = scalar_lea.vmem %s13, 64
  %v1048 = vld [vmem:[%s1047] sm:$0xff]
  %v1049 = vld [vmem:[%s1047 + $0x8] sm:$0xff]
  %v1050 = vld [vmem:[%s1047 + $0x10] sm:$0xff]
  %v1051 = vld [vmem:[%s1047 + $0x18] sm:$0xff]
  %v1053 = vsel %vm96, %v1043, 0
  %v1056 = vsel %vm96, %v1044, 0
  %v1059 = vsel %vm96, %v1045, 0
  %v1062 = vsel %vm96, %v1046, 0
  %1064 = vmatpush.msra.mxu0 0.0
  %1065 = vmatpush.msra.mxu0 0.0
  %1066 = vmatpush.msra.mxu0 0.0
  %1067 = vmatpush.msra.mxu0 0.0
  %1068 = vmatpush.msra.mxu0 0.0
  %1069 = vmatpush.msra.mxu0 0.0
  %1070 = vmatpush.msra.mxu0 0.0
  %1071 = vmatpush.msra.mxu0 0.0
  %1072 = vmatpush.msra.mxu0 0.0
  %1073 = vmatpush.msra.mxu0 0.0
  %1074 = vmatpush.msra.mxu0 0.0
  %1075 = vmatpush.msra.mxu0 0.0
  %1076 = vmatpush.msra.mxu0 %v1051
  %1077 = vmatpush.msra.mxu0 %v1050
  %1078 = vmatpush.msra.mxu0 %v1049
  %1079 = vmatpush.msra.mxu0 %v1048
  %1080 = vmatmul.f32.gmra.mxu0 %v1053
  %v1081 = vpop.f32.mrf.mxu0
  %v1082 = vadd.f32 0.0, %v1081
  %1083 = vmatmul.f32.gmra.mxu0 %v1056
  %v1084 = vpop.f32.mrf.mxu0
  %v1085 = vadd.f32 0.0, %v1084
  %1086 = vmatmul.f32.gmra.mxu0 %v1059
  %v1087 = vpop.f32.mrf.mxu0
  %v1088 = vadd.f32 0.0, %v1087
  %1089 = vmatmul.f32.gmra.mxu0 %v1062
  %v1090 = vpop.f32.mrf.mxu0
  %v1091 = vadd.f32 0.0, %v1090
  %1092 = vdwg.mxu0
  %v1093 = vadd.f32 %v999, %v1082
  %v1094 = vadd.f32 %v1002, %v1085
  %v1095 = vadd.f32 %v1005, %v1088
  %v1096 = vadd.f32 %v1008, %v1091
  %v1097 = vld [vmem:[%s14] sm:$0x1]
  %v1099 = vperm.slane %v1097, 0
  %v1101 = vadd.f32 %v1093, %v1099
  %v1102 = vadd.f32 %v1094, %v1099
  %v1103 = vadd.f32 %v1095, %v1099
  %v1104 = vadd.f32 %v1096, %v1099
  %v1105 = vmax.f32 %v1101, 0.0
  %v1106 = vmax.f32 %v1102, 0.0
  %v1107 = vmax.f32 %v1103, 0.0
  %v1108 = vmax.f32 %v1104, 0.0
  %v1109 = vld [vmem:[%s15] sm:$0xff]
  %v1110 = vld [vmem:[%s15 + $0x8] sm:$0xff]
  %v1111 = vld [vmem:[%s15 + $0x10] sm:$0xff]
  %v1112 = vld [vmem:[%s15 + $0x18] sm:$0xff]
  %v1113 = vld [vmem:[%s15 + $0x20] sm:$0xff]
  %v1114 = vld [vmem:[%s15 + $0x28] sm:$0xff]
  %v1115 = vld [vmem:[%s15 + $0x30] sm:$0xff]
  %v1116 = vld [vmem:[%s15 + $0x38] sm:$0xff]
  %vm1117 = vcmask 523264
  %v1119 = vsel %vm1117, %v1105, 0
  %v1122 = vsel %vm1117, %v1106, 0
  %v1125 = vsel %vm1117, %v1107, 0
  %v1128 = vsel %vm1117, %v1108, 0
  %1130 = vmatpush.msra.mxu0 0.0
  %1131 = vmatpush.msra.mxu0 0.0
  %1132 = vmatpush.msra.mxu0 0.0
  %1133 = vmatpush.msra.mxu0 0.0
  %1134 = vmatpush.msra.mxu0 0.0
  %1135 = vmatpush.msra.mxu0 0.0
  %1136 = vmatpush.msra.mxu0 0.0
  %1137 = vmatpush.msra.mxu0 0.0
  %1138 = vmatpush.msra.mxu0 %v1116
  %1139 = vmatpush.msra.mxu0 %v1115
  %1140 = vmatpush.msra.mxu0 %v1114
  %1141 = vmatpush.msra.mxu0 %v1113
  %1142 = vmatpush.msra.mxu0 %v1112
  %1143 = vmatpush.msra.mxu0 %v1111
  %1144 = vmatpush.msra.mxu0 %v1110
  %1145 = vmatpush.msra.mxu0 %v1109
  %1146 = vmatmul.f32.gmra.mxu0 %v1119
  %v1147 = vpop.f32.mrf.mxu0
  %v1148 = vadd.f32 0.0, %v1147
  %1149 = vmatmul.f32.gmra.mxu0 %v1122
  %v1150 = vpop.f32.mrf.mxu0
  %v1151 = vadd.f32 0.0, %v1150
  %1152 = vmatmul.f32.gmra.mxu0 %v1125
  %v1153 = vpop.f32.mrf.mxu0
  %v1154 = vadd.f32 0.0, %v1153
  %1155 = vmatmul.f32.gmra.mxu0 %v1128
  %v1156 = vpop.f32.mrf.mxu0
  %v1157 = vadd.f32 0.0, %v1156
  %1158 = vdwg.mxu0
  %v1159 = vld [vmem:[%s16] sm:$0xff]
  %v1160 = vld [vmem:[%s16 + $0x8] sm:$0xff]
  %v1161 = vld [vmem:[%s16 + $0x10] sm:$0xff]
  %v1162 = vld [vmem:[%s16 + $0x18] sm:$0xff]
  %v1164 = vsel %vm96, %v75, 0
  %v1167 = vsel %vm96, %v76, 0
  %v1170 = vsel %vm96, %v77, 0
  %v1173 = vsel %vm96, %v78, 0
  %1175 = vmatpush.msra.mxu0 0.0
  %1176 = vmatpush.msra.mxu0 0.0
  %1177 = vmatpush.msra.mxu0 0.0
  %1178 = vmatpush.msra.mxu0 0.0
  %1179 = vmatpush.msra.mxu0 0.0
  %1180 = vmatpush.msra.mxu0 0.0
  %1181 = vmatpush.msra.mxu0 0.0
  %1182 = vmatpush.msra.mxu0 0.0
  %1183 = vmatpush.msra.mxu0 0.0
  %1184 = vmatpush.msra.mxu0 0.0
  %1185 = vmatpush.msra.mxu0 0.0
  %1186 = vmatpush.msra.mxu0 0.0
  %1187 = vmatpush.msra.mxu0 %v1162
  %1188 = vmatpush.msra.mxu0 %v1161
  %1189 = vmatpush.msra.mxu0 %v1160
  %1190 = vmatpush.msra.mxu0 %v1159
  %1191 = vmatmul.f32.gmra.mxu0 %v1164
  %v1192 = vpop.f32.mrf.mxu0
  %v1193 = vadd.f32 0.0, %v1192
  %1194 = vmatmul.f32.gmra.mxu0 %v1167
  %v1195 = vpop.f32.mrf.mxu0
  %v1196 = vadd.f32 0.0, %v1195
  %1197 = vmatmul.f32.gmra.mxu0 %v1170
  %v1198 = vpop.f32.mrf.mxu0
  %v1199 = vadd.f32 0.0, %v1198
  %1200 = vmatmul.f32.gmra.mxu0 %v1173
  %v1201 = vpop.f32.mrf.mxu0
  %v1202 = vadd.f32 0.0, %v1201
  %1203 = vdwg.mxu0
  %v1204 = vadd.f32 %v1148, %v1193
  %v1205 = vadd.f32 %v1151, %v1196
  %v1206 = vadd.f32 %v1154, %v1199
  %v1207 = vadd.f32 %v1157, %v1202
  %v1208 = vld [vmem:[%s17] sm:$0x1]
  %v1210 = vperm.slane %v1208, 0
  %v1212 = vadd.f32 %v1204, %v1210
  %v1213 = vadd.f32 %v1205, %v1210
  %v1214 = vadd.f32 %v1206, %v1210
  %v1215 = vadd.f32 %v1207, %v1210
  %v1216 = vxor.u32 %v1212, 2147483648
  %v1217 = vxor.u32 %v1213, 2147483648
  %v1218 = vxor.u32 %v1214, 2147483648
  %v1219 = vxor.u32 %v1215, 2147483648
  %v1220 = vmul.f32 %v1216, 1.442695
  %v1221 = vpow.pop %v1220
  %v1222 = vmul.f32 %v1217, 1.442695
  %v1223 = vpow.pop %v1222
  %v1224 = vmul.f32 %v1218, 1.442695
  %v1225 = vpow.pop %v1224
  %v1226 = vmul.f32 %v1219, 1.442695
  %v1227 = vpow.pop %v1226
  %v1228 = vadd.f32 %v1221, 1.0
  %v1229 = vadd.f32 %v1223, 1.0
  %v1230 = vadd.f32 %v1225, 1.0
  %v1231 = vadd.f32 %v1227, 1.0
  %v1232 = vrcp.pop %v1228
  %v1233 = vmul.f32 %v1228, %v1232
  %v1234 = vsub.f32 1.0, %v1233
  %v1235 = vmul.f32 %v1232, %v1234
  %v1236 = vadd.f32 %v1232, %v1235
  %vm1237 = vweird.f32 %v1228
  %vm1238 = vweird.f32 %v1232
  %vm1239 = vmor %vm1237, %vm1238
  %v1240 = vsel %vm1239, %v1232, %v1236
  %v1241 = vand.u32 2147483647, %v1228
  %vm1242 = vcmp.eq.f32.partialorder %v1241, 8.507059e+37
  %v1243 = vand.u32 %v1228, 2147483648
  %v1244 = vor.u32 1.1754944e-38, %v1243
  %v1245 = vsel %vm1242, %v1244, %v1240
  %v1246 = vmul.f32 1.0, %v1245
  %v1247 = vrcp.pop %v1229
  %v1248 = vmul.f32 %v1229, %v1247
  %v1249 = vsub.f32 1.0, %v1248
  %v1250 = vmul.f32 %v1247, %v1249
  %v1251 = vadd.f32 %v1247, %v1250
  %vm1252 = vweird.f32 %v1229
  %vm1253 = vweird.f32 %v1247
  %vm1254 = vmor %vm1252, %vm1253
  %v1255 = vsel %vm1254, %v1247, %v1251
  %v1256 = vand.u32 2147483647, %v1229
  %vm1257 = vcmp.eq.f32.partialorder %v1256, 8.507059e+37
  %v1258 = vand.u32 %v1229, 2147483648
  %v1259 = vor.u32 1.1754944e-38, %v1258
  %v1260 = vsel %vm1257, %v1259, %v1255
  %v1261 = vmul.f32 1.0, %v1260
  %v1262 = vrcp.pop %v1230
  %v1263 = vmul.f32 %v1230, %v1262
  %v1264 = vsub.f32 1.0, %v1263
  %v1265 = vmul.f32 %v1262, %v1264
  %v1266 = vadd.f32 %v1262, %v1265
  %vm1267 = vweird.f32 %v1230
  %vm1268 = vweird.f32 %v1262
  %vm1269 = vmor %vm1267, %vm1268
  %v1270 = vsel %vm1269, %v1262, %v1266
  %v1271 = vand.u32 2147483647, %v1230
  %vm1272 = vcmp.eq.f32.partialorder %v1271, 8.507059e+37
  %v1273 = vand.u32 %v1230, 2147483648
  %v1274 = vor.u32 1.1754944e-38, %v1273
  %v1275 = vsel %vm1272, %v1274, %v1270
  %v1276 = vmul.f32 1.0, %v1275
  %v1277 = vrcp.pop %v1231
  %v1278 = vmul.f32 %v1231, %v1277
  %v1279 = vsub.f32 1.0, %v1278
  %v1280 = vmul.f32 %v1277, %v1279
  %v1281 = vadd.f32 %v1277, %v1280
  %vm1282 = vweird.f32 %v1231
  %vm1283 = vweird.f32 %v1277
  %vm1284 = vmor %vm1282, %vm1283
  %v1285 = vsel %vm1284, %v1277, %v1281
  %v1286 = vand.u32 2147483647, %v1231
  %vm1287 = vcmp.eq.f32.partialorder %v1286, 8.507059e+37
  %v1288 = vand.u32 %v1231, 2147483648
  %v1289 = vor.u32 1.1754944e-38, %v1288
  %v1290 = vsel %vm1287, %v1289, %v1285
  %v1291 = vmul.f32 1.0, %v1290
  %v1292 = vld [vmem:[%s18] sm:$0x1]
  %v1294 = vperm.slane %v1292, 0
  %1295 = vrot.lane.b32.xlu0 %v1294, 64
  %v1296 = vpop.permute.xlu0 %1295
  %v1298 = vadd.f32 %v1148, %v1296
  %v1299 = vadd.f32 %v1151, %v1296
  %v1300 = vadd.f32 %v1154, %v1296
  %v1301 = vadd.f32 %v1157, %v1296
  %v1302 = vld [vmem:[%s19] sm:$0x1]
  %v1304 = vperm.slane %v1302, 0
  %1305 = vrot.lane.b32.xlu0 %v1304, 64
  %v1306 = vpop.permute.xlu0 %1305
  %v1308 = vadd.f32 %v1193, %v1306
  %v1309 = vadd.f32 %v1196, %v1306
  %v1310 = vadd.f32 %v1199, %v1306
  %v1311 = vadd.f32 %v1202, %v1306
  %1316 = vrot.lane.b32.xlu0 %v1308, 64
  %v1317 = vpop.permute.xlu0 %1316
  %1318 = vrot.lane.b32.xlu0 %v1309, 64
  %v1319 = vpop.permute.xlu0 %1318
  %1320 = vrot.lane.b32.xlu0 %v1310, 64
  %v1321 = vpop.permute.xlu0 %1320
  %1322 = vrot.lane.b32.xlu0 %v1311, 64
  %v1323 = vpop.permute.xlu0 %1322
  %v1328 = vmul.f32 %v1246, %v1317
  %v1329 = vmul.f32 %v1261, %v1319
  %v1330 = vmul.f32 %v1276, %v1321
  %v1331 = vmul.f32 %v1291, %v1323
  %1336 = vrot.lane.b32.xlu0 %v1328, 64
  %v1337 = vpop.permute.xlu0 %1336
  %1338 = vrot.lane.b32.xlu0 %v1329, 64
  %v1339 = vpop.permute.xlu0 %1338
  %1340 = vrot.lane.b32.xlu0 %v1330, 64
  %v1341 = vpop.permute.xlu0 %1340
  %1342 = vrot.lane.b32.xlu0 %v1331, 64
  %v1343 = vpop.permute.xlu0 %1342
  %v1348 = vadd.f32 %v1298, %v1337
  %v1349 = vadd.f32 %v1299, %v1339
  %v1350 = vadd.f32 %v1300, %v1341
  %v1351 = vadd.f32 %v1301, %v1343
  %v1352 = vtanh.pop %v1348
  %v1353 = vtanh.pop %v1349
  %v1354 = vtanh.pop %v1350
  %v1355 = vtanh.pop %v1351
  %v1356 = vsub.f32 1.0, %v1246
  %v1357 = vsub.f32 1.0, %v1261
  %v1358 = vsub.f32 1.0, %v1276
  %v1359 = vsub.f32 1.0, %v1291
  %1364 = vrot.lane.b32.xlu0 %v1352, 96
  %v1365 = vpop.permute.xlu0 %1364
  %1366 = vrot.lane.b32.xlu0 %v1353, 96
  %v1367 = vpop.permute.xlu0 %1366
  %1368 = vrot.lane.b32.xlu0 %v1354, 96
  %v1369 = vpop.permute.xlu0 %1368
  %1370 = vrot.lane.b32.xlu0 %v1355, 96
  %v1371 = vpop.permute.xlu0 %1370
  %v1376 = vmul.f32 %v1356, %v1365
  %v1377 = vmul.f32 %v1357, %v1367
  %v1378 = vmul.f32 %v1358, %v1369
  %v1379 = vmul.f32 %v1359, %v1371
  %1380 = vrot.lane.b32.xlu0 %v75, 32
  %v1381 = vpop.permute.xlu0 %1380
  %1382 = vrot.lane.b32.xlu0 %v76, 32
  %v1383 = vpop.permute.xlu0 %1382
  %1384 = vrot.lane.b32.xlu0 %v77, 32
  %v1385 = vpop.permute.xlu0 %1384
  %1386 = vrot.lane.b32.xlu0 %v78, 32
  %v1387 = vpop.permute.xlu0 %1386
  %v1392 = vmul.f32 %v1246, %v1381
  %v1393 = vmul.f32 %v1261, %v1383
  %v1394 = vmul.f32 %v1276, %v1385
  %v1395 = vmul.f32 %v1291, %v1387
  %v1396 = vadd.f32 %v1376, %v1392
  %v1397 = vadd.f32 %v1377, %v1393
  %v1398 = vadd.f32 %v1378, %v1394
  %v1399 = vadd.f32 %v1379, %v1395
  %v1400 = vld [vmem:[%s20] sm:$0xff]
  %v1401 = vld [vmem:[%s20 + $0x8] sm:$0xff]
  %v1402 = vld [vmem:[%s20 + $0x10] sm:$0xff]
  %v1403 = vld [vmem:[%s20 + $0x18] sm:$0xff]
  %v1404 = vld [vmem:[%s21] sm:$0x1]
  %v1406 = vperm.slane %v1404, 0
  %1412 = vrot.lane.b32.xlu0 %v1396, 96
  %v1413 = vpop.permute.xlu0 %1412
  %1414 = vrot.lane.b32.xlu0 %v1397, 96
  %v1415 = vpop.permute.xlu0 %1414
  %1416 = vrot.lane.b32.xlu0 %v1398, 96
  %v1417 = vpop.permute.xlu0 %1416
  %1418 = vrot.lane.b32.xlu0 %v1399, 96
  %v1419 = vpop.permute.xlu0 %1418
  %v1420 = vsel %vm96, %v1413, 0
  %v1422 = vsel %vm96, %v1415, 0
  %v1424 = vsel %vm96, %v1417, 0
  %v1426 = vsel %vm96, %v1419, 0
  %1428 = vmatpush.msra.mxu0 0.0
  %1429 = vmatpush.msra.mxu0 0.0
  %1430 = vmatpush.msra.mxu0 0.0
  %1431 = vmatpush.msra.mxu0 0.0
  %1432 = vmatpush.msra.mxu0 0.0
  %1433 = vmatpush.msra.mxu0 0.0
  %1434 = vmatpush.msra.mxu0 0.0
  %1435 = vmatpush.msra.mxu0 0.0
  %1436 = vmatpush.msra.mxu0 0.0
  %1437 = vmatpush.msra.mxu0 0.0
  %1438 = vmatpush.msra.mxu0 0.0
  %1439 = vmatpush.msra.mxu0 0.0
  %1440 = vmatpush.msra.mxu0 %v1403
  %1441 = vmatpush.msra.mxu0 %v1402
  %1442 = vmatpush.msra.mxu0 %v1401
  %1443 = vmatpush.msra.mxu0 %v1400
  %1444 = vmatmul.f32.gmra.mxu0 %v1420
  %v1445 = vpop.f32.mrf.mxu0
  %v1446 = vadd.f32 %v1406, %v1445
  %1447 = vmatmul.f32.gmra.mxu0 %v1422
  %v1448 = vpop.f32.mrf.mxu0
  %v1449 = vadd.f32 %v1406, %v1448
  %1450 = vmatmul.f32.gmra.mxu0 %v1424
  %v1451 = vpop.f32.mrf.mxu0
  %v1452 = vadd.f32 %v1406, %v1451
  %1453 = vmatmul.f32.gmra.mxu0 %v1426
  %v1454 = vpop.f32.mrf.mxu0
  %v1455 = vadd.f32 %v1406, %v1454
  %1456 = vdwg.mxu0
  %v1457 = vxor.u32 %v1446, 2147483648
  %v1458 = vxor.u32 %v1449, 2147483648
  %v1459 = vxor.u32 %v1452, 2147483648
  %v1460 = vxor.u32 %v1455, 2147483648
  %v1461 = vmul.f32 %v1457, 1.442695
  %v1462 = vpow.pop %v1461
  %v1463 = vmul.f32 %v1458, 1.442695
  %v1464 = vpow.pop %v1463
  %v1465 = vmul.f32 %v1459, 1.442695
  %v1466 = vpow.pop %v1465
  %v1467 = vmul.f32 %v1460, 1.442695
  %v1468 = vpow.pop %v1467
  %v1469 = vadd.f32 %v1462, 1.0
  %v1470 = vadd.f32 %v1464, 1.0
  %v1471 = vadd.f32 %v1466, 1.0
  %v1472 = vadd.f32 %v1468, 1.0
  %v1473 = vrcp.pop %v1469
  %v1474 = vmul.f32 %v1469, %v1473
  %v1475 = vsub.f32 1.0, %v1474
  %v1476 = vmul.f32 %v1473, %v1475
  %v1477 = vadd.f32 %v1473, %v1476
  %vm1478 = vweird.f32 %v1469
  %vm1479 = vweird.f32 %v1473
  %vm1480 = vmor %vm1478, %vm1479
  %v1481 = vsel %vm1480, %v1473, %v1477
  %v1482 = vand.u32 2147483647, %v1469
  %vm1483 = vcmp.eq.f32.partialorder %v1482, 8.507059e+37
  %v1484 = vand.u32 %v1469, 2147483648
  %v1485 = vor.u32 1.1754944e-38, %v1484
  %v1486 = vsel %vm1483, %v1485, %v1481
  %v1487 = vmul.f32 1.0, %v1486
  %v1488 = vrcp.pop %v1470
  %v1489 = vmul.f32 %v1470, %v1488
  %v1490 = vsub.f32 1.0, %v1489
  %v1491 = vmul.f32 %v1488, %v1490
  %v1492 = vadd.f32 %v1488, %v1491
  %vm1493 = vweird.f32 %v1470
  %vm1494 = vweird.f32 %v1488
  %vm1495 = vmor %vm1493, %vm1494
  %v1496 = vsel %vm1495, %v1488, %v1492
  %v1497 = vand.u32 2147483647, %v1470
  %vm1498 = vcmp.eq.f32.partialorder %v1497, 8.507059e+37
  %v1499 = vand.u32 %v1470, 2147483648
  %v1500 = vor.u32 1.1754944e-38, %v1499
  %v1501 = vsel %vm1498, %v1500, %v1496
  %v1502 = vmul.f32 1.0, %v1501
  %v1503 = vrcp.pop %v1471
  %v1504 = vmul.f32 %v1471, %v1503
  %v1505 = vsub.f32 1.0, %v1504
  %v1506 = vmul.f32 %v1503, %v1505
  %v1507 = vadd.f32 %v1503, %v1506
  %vm1508 = vweird.f32 %v1471
  %vm1509 = vweird.f32 %v1503
  %vm1510 = vmor %vm1508, %vm1509
  %v1511 = vsel %vm1510, %v1503, %v1507
  %v1512 = vand.u32 2147483647, %v1471
  %vm1513 = vcmp.eq.f32.partialorder %v1512, 8.507059e+37
  %v1514 = vand.u32 %v1471, 2147483648
  %v1515 = vor.u32 1.1754944e-38, %v1514
  %v1516 = vsel %vm1513, %v1515, %v1511
  %v1517 = vmul.f32 1.0, %v1516
  %v1518 = vrcp.pop %v1472
  %v1519 = vmul.f32 %v1472, %v1518
  %v1520 = vsub.f32 1.0, %v1519
  %v1521 = vmul.f32 %v1518, %v1520
  %v1522 = vadd.f32 %v1518, %v1521
  %vm1523 = vweird.f32 %v1472
  %vm1524 = vweird.f32 %v1518
  %vm1525 = vmor %vm1523, %vm1524
  %v1526 = vsel %vm1525, %v1518, %v1522
  %v1527 = vand.u32 2147483647, %v1472
  %vm1528 = vcmp.eq.f32.partialorder %v1527, 8.507059e+37
  %v1529 = vand.u32 %v1472, 2147483648
  %v1530 = vor.u32 1.1754944e-38, %v1529
  %v1531 = vsel %vm1528, %v1530, %v1526
  %v1532 = vmul.f32 1.0, %v1531
  %v1533 = vld [vmem:[%s2] sm:$0xff]
  %v1534 = vld [vmem:[%s2 + $0x8] sm:$0xff]
  %v1535 = vld [vmem:[%s2 + $0x10] sm:$0xff]
  %v1536 = vld [vmem:[%s2 + $0x18] sm:$0xff]
  %v1537 = vmul.f32 %v1533, %v1487
  %v1538 = vmul.f32 %v1534, %v1502
  %v1539 = vmul.f32 %v1535, %v1517
  %v1540 = vmul.f32 %v1536, %v1532
  %1541 = vmatpush.msra.mxu0 0.0
  %1542 = vmatpush.msra.mxu0 0.0
  %1543 = vmatpush.msra.mxu0 0.0
  %1544 = vmatpush.msra.mxu0 0.0
  %1545 = vmatpush.msra.mxu0 0.0
  %1546 = vmatpush.msra.mxu0 0.0
  %1547 = vmatpush.msra.mxu0 0.0
  %1548 = vmatpush.msra.mxu0 0.0
  %1549 = vmatpush.msra.mxu0 0.0
  %1550 = vmatpush.msra.mxu0 0.0
  %1551 = vmatpush.msra.mxu0 0.0
  %1552 = vmatpush.msra.mxu0 0.0
  %1553 = vmatpush.msra.mxu0 %v1540
  %1554 = vmatpush.msra.mxu0 %v1539
  %1555 = vmatpush.msra.mxu0 %v1538
  %1556 = vmatpush.msra.mxu0 %v1537
  %1557 = vmatmul.f32.gmra.mxu0 %v752
  %v1558 = vpop.f32.mrf.mxu0
  %v1559 = vadd.f32 0.0, %v1558
  %1560 = vdwg.mxu0
  %v1562 = vsel %vm829, %v1559, 0
  %1564 = vmatpush.msra.mxu0 0.0
  %1565 = vmatpush.msra.mxu0 0.0
  %1566 = vmatpush.msra.mxu0 0.0
  %1567 = vmatpush.msra.mxu0 0.0
  %1568 = vmatpush.msra.mxu0 0.0
  %1569 = vmatpush.msra.mxu0 0.0
  %1570 = vmatpush.msra.mxu0 0.0
  %1571 = vmatpush.msra.mxu0 0.0
  %1572 = vmatpush.msra.mxu0 0.0
  %1573 = vmatpush.msra.mxu0 0.0
  %1574 = vmatpush.msra.mxu0 0.0
  %1575 = vmatpush.msra.mxu0 0.0
  %1576 = vmatpush.msra.mxu0 0.0
  %1577 = vmatpush.msra.mxu0 0.0
  %1578 = vmatpush.msra.mxu0 0.0
  %1579 = vmatpush.msra.mxu0 %v1562
  %1580 = vmatmul.f32.gmra.mxu0 %v818
  %v1581 = vpop.f32.mrf.mxu0
  %v1582 = vadd.f32 0.0, %v1581
  %1583 = vmatmul.f32.gmra.mxu0 %v821
  %v1584 = vpop.f32.mrf.mxu0
  %v1585 = vadd.f32 0.0, %v1584
  %1586 = vmatmul.f32.gmra.mxu0 %v824
  %v1587 = vpop.f32.mrf.mxu0
  %v1588 = vadd.f32 0.0, %v1587
  %1589 = vmatmul.f32.gmra.mxu0 %v827
  %v1590 = vpop.f32.mrf.mxu0
  %v1591 = vadd.f32 0.0, %v1590
  %1592 = vdwg.mxu0
  %1597 = vrot.lane.b32.xlu0 %v1582, 4
  %v1598 = vpop.permute.xlu0 %1597
  %1599 = vrot.lane.b32.xlu0 %v1585, 4
  %v1600 = vpop.permute.xlu0 %1599
  %1601 = vrot.lane.b32.xlu0 %v1588, 4
  %v1602 = vpop.permute.xlu0 %1601
  %1603 = vrot.lane.b32.xlu0 %v1591, 4
  %v1604 = vpop.permute.xlu0 %1603
  %v1609 = vmul.f32 %v1487, %v1598
  %v1610 = vmul.f32 %v1502, %v1600
  %v1611 = vmul.f32 %v1517, %v1602
  %v1612 = vmul.f32 %v1532, %v1604
  %1617 = vrot.lane.b32.xlu0 %v1609, 124
  %v1618 = vpop.permute.xlu0 %1617
  %1619 = vrot.lane.b32.xlu0 %v1610, 124
  %v1620 = vpop.permute.xlu0 %1619
  %1621 = vrot.lane.b32.xlu0 %v1611, 124
  %v1622 = vpop.permute.xlu0 %1621
  %1623 = vrot.lane.b32.xlu0 %v1612, 124
  %v1624 = vpop.permute.xlu0 %1623
  %vm1629 = vcmask 31744
  %v1630 = vsel %vm1629, %v1618, 0.0
  %1631 = vadd.xlane.f32.xlu0 %v1630
  %v1632 = vpop.xlane.xlu0 %1631
  %v1633 = vsel %vm1629, %v1620, 0.0
  %1634 = vadd.xlane.f32.xlu0 %v1633
  %v1635 = vpop.xlane.xlu0 %1634
  %v1636 = vsel %vm1629, %v1622, 0.0
  %1637 = vadd.xlane.f32.xlu0 %v1636
  %v1638 = vpop.xlane.xlu0 %1637
  %v1639 = vsel %vm1629, %v1624, 0.0
  %1640 = vadd.xlane.f32.xlu0 %v1639
  %v1641 = vpop.xlane.xlu0 %1640
  %1646 = vst.msk [vmem:[%s22] sm:$0xff] %vm96, %v1413
  %1647 = vst.msk [vmem:[%s22 + $0x8] sm:$0xff] %vm96, %v1415
  %1648 = vst.msk [vmem:[%s22 + $0x10] sm:$0xff] %vm96, %v1417
  %1649 = vst.msk [vmem:[%s22 + $0x18] sm:$0xff] %vm96, %v1419
  %vm1650 = vcmask 326912
  %1651 = vst.msk [vmem:[%s22] sm:$0xff] %vm1650, %v1632
  %1652 = vst.msk [vmem:[%s22 + $0x8] sm:$0xff] %vm1650, %v1635
  %1653 = vst.msk [vmem:[%s22 + $0x10] sm:$0xff] %vm1650, %v1638
  %1654 = vst.msk [vmem:[%s22 + $0x18] sm:$0xff] %vm1650, %v1641
  // Predicated region
  $region90: #{phycell_forward.1} parent=0 // pred_check
    _
  $region91: #{phycell_forward.1} parent=0 // pred_check_branch
    %1656 = sbr.rel (0) target = $region93
  $region92: #{phycell_forward.1} parent=0 // pred_region
    _
  $region93: #{phycell_forward.1} parent=0 // pred_fallthru
    _
  // Predicated region
  $region94: #{phycell_forward.1} parent=0 // pred_check
    _
  $region95: #{phycell_forward.1} parent=0 // pred_check_branch
    %1658 = sbr.rel (0) target = $region97
  $region96: #{phycell_forward.1} parent=0 // pred_region
    _
  $region97: #{phycell_forward.1} parent=0 // pred_fallthru
    _

</llo_original>
